<compile_context>
chip_gen: v7x
topology: tpu7x:2x2x1
jax: 0.10.0
libtpu: 0.0.40
codegen_flags: <defaults>
</compile_context>

<pallas_src>
import math
from functools import partial

import jax
import jax.numpy as jnp
from jax import lax
from jax.experimental import pallas as pl
from jax.experimental.pallas import tpu as pltpu


# ----------------------------- shared math helpers ----------------------------

def _softmax(x):
    m = jnp.max(x, axis=-1, keepdims=True)
    e = jnp.exp(x - m)
    return e / jnp.sum(e, axis=-1, keepdims=True)


def _gelu(x):
    # TODO(synk): PyTorch nn.GELU() default is the exact erf GELU; the tanh
    # approximation is used here for a guaranteed Mosaic lowering (|diff|~1e-3).
    c = math.sqrt(2.0 / math.pi)
    return 0.5 * x * (1.0 + jnp.tanh(c * (x + 0.044715 * x * x * x)))


def _layernorm(x, g, b, eps=1e-5):
    mu = jnp.mean(x, axis=-1, keepdims=True)
    var = jnp.mean((x - mu) ** 2, axis=-1, keepdims=True)
    return (x - mu) * lax.rsqrt(var + eps) * g + b


# ------------------------------- fused block kernel ----------------------------

def _svgt_kernel(x_ref, a_ref, wqkv_ref, bqkv_ref, wo_ref, bo_ref,
                 ln1g_ref, ln1b_ref, ln2g_ref, ln2b_ref,
                 w1_ref, b1_ref, w2_ref, b2_ref, out_ref,
                 *, num_heads, d_model, lam):
    H = num_heads
    x = x_ref[0]                                   # (N, D)   D = time_length+1
    a = a_ref[0]                                   # (N, N)

    # softmax(relu(A_spat)) — computed once, shared by every head.
    a_sm = _softmax(jnp.maximum(a, 0.0))

    # --- single batched QKV projection for all heads ---------------------------
    xb = jnp.broadcast_to(x[None], (3 * H,) + x.shape)            # (3H, N, D)
    qkv = jnp.einsum("pnd,pdm->pnm", xb, wqkv_ref[...],
                     preferred_element_type=jnp.float32) + bqkv_ref[...]
    q, k, v = qkv[:H], qkv[H:2 * H], qkv[2 * H:]                   # (H, N, dm)

    # --- graph-mixed attention, all heads batched ------------------------------
    scale = 1.0 / math.sqrt(d_model)
    scores = jnp.einsum("hqd,hkd->hqk", q, k,
                        preferred_element_type=jnp.float32) * scale      # (H,N,N)
    attn = (1.0 - lam) * _softmax(scores) + lam * a_sm[None]
    heads = jnp.einsum("hqk,hkd->hqd", _softmax(attn), v,
                       preferred_element_type=jnp.float32)               # (H,N,dm)

    # W_O applied per head and accumulated (== concat(heads) @ W_O, no concat).
    partials = jnp.einsum("hnd,hdo->hno", heads, wo_ref[...],
                          preferred_element_type=jnp.float32)            # (H,N,D)
    out_o = jnp.sum(partials, axis=0) + bo_ref[...]                      # (N, D)

    # --- residual + LayerNorm + feed forward -----------------------------------
    res1 = _layernorm(out_o, ln1g_ref[...], ln1b_ref[...]) + x
    hidden = _gelu(jnp.dot(res1, w1_ref[...],
                           preferred_element_type=jnp.float32) + b1_ref[...])
    ff = jnp.dot(hidden, w2_ref[...],
                 preferred_element_type=jnp.float32) + b2_ref[...]
    out_ref[0] = _layernorm(ff, ln2g_ref[...], ln2b_ref[...]) + res1


_PARAM_ORDER = ["w_qkv", "b_qkv", "w_o", "b_o",
                "ln1_g", "ln1_b", "ln2_g", "ln2_b",
                "w1", "b1", "w2", "b2"]


def svgtformer(X, A_spat, p, *, num_heads, d_model, lam):
    bs, N, D = X.shape

    def full(shape):
        return pl.BlockSpec(shape, lambda b, _n=len(shape): (0,) * _n)

    kernel = partial(_svgt_kernel, num_heads=num_heads, d_model=d_model, lam=lam)
    weights = [p[name] for name in _PARAM_ORDER]
    return pl.pallas_call(
        kernel,
        out_shape=jax.ShapeDtypeStruct((bs, N, D), jnp.float32),
        grid=(bs,),
        in_specs=[pl.BlockSpec((1, N, D), lambda b: (b, 0, 0)),
                  pl.BlockSpec((1, N, N), lambda b: (b, 0, 0))]
                 + [full(w.shape) for w in weights],
        out_specs=pl.BlockSpec((1, N, D), lambda b: (b, 0, 0)),
        compiler_params=pltpu.CompilerParams(dimension_semantics=("parallel",)),
    )(X, A_spat, *weights)


# ------------------------------ parameter setup --------------------------------

def init_linear(key, fan_in, fan_out):
    # PyTorch nn.Linear default init; weight stored pre-transposed as (in, out).
    kw, kb = jax.random.split(key)
    bound = 1.0 / math.sqrt(fan_in)
    w = jax.random.uniform(kw, (fan_in, fan_out), jnp.float32, -bound, bound)
    b = jax.random.uniform(kb, (fan_out,), jnp.float32, -bound, bound)
    return w, b


def init_svgt_params(key, d_in, d_model, d_ff, num_heads):
    keys = jax.random.split(key, 3 * num_heads + 3)
    wq, wk, wv, bq, bk, bv = [], [], [], [], [], []
    for h in range(num_heads):
        w, b = init_linear(keys[3 * h + 0], d_in, d_model); wq.append(w); bq.append(b)
        w, b = init_linear(keys[3 * h + 1], d_in, d_model); wk.append(w); bk.append(b)
        w, b = init_linear(keys[3 * h + 2], d_in, d_model); wv.append(w); bv.append(b)
    wo, bo = init_linear(keys[-3], d_model * num_heads, d_in)
    w1, b1 = init_linear(keys[-2], d_in, d_ff)
    w2, b2 = init_linear(keys[-1], d_ff, d_in)
    return {
        # all-head Q/K/V weights stacked on a leading axis -> one batched matmul
        "w_qkv": jnp.stack(wq + wk + wv),                 # (3H, d_in, dm)
        "b_qkv": jnp.stack(bq + bk + bv)[:, None, :],     # (3H, 1, dm)
        # W_O split per head so heads are merged by accumulation (no concat)
        "w_o": wo.reshape(num_heads, d_model, d_in),      # (H, dm, d_in)
        "b_o": bo[None, :],
        "ln1_g": jnp.ones((1, d_in), jnp.float32), "ln1_b": jnp.zeros((1, d_in), jnp.float32),
        "ln2_g": jnp.ones((1, d_in), jnp.float32), "ln2_b": jnp.zeros((1, d_in), jnp.float32),
        "w1": w1, "b1": b1[None, :],
        "w2": w2, "b2": b2[None, :],
    }


# --------------------------- plain-JAX reference check -------------------------

def svgtformer_ref(X, A_spat, p, *, num_heads, d_model, lam):
    H = num_heads
    a_sm = jax.nn.softmax(jnp.maximum(A_spat, 0.0), axis=-1)
    heads = []
    for h in range(H):
        q = X @ p["w_qkv"][h] + p["b_qkv"][h]
        k = X @ p["w_qkv"][H + h] + p["b_qkv"][H + h]
        v = X @ p["w_qkv"][2 * H + h] + p["b_qkv"][2 * H + h]
        scores = jnp.einsum("bnd,bmd->bnm", q, k) / math.sqrt(d_model)
        attn = (1.0 - lam) * jax.nn.softmax(scores, -1) + lam * a_sm
        heads.append(jnp.einsum("bnm,bmd->bnd", jax.nn.softmax(attn, -1), v))
    cat = jnp.concatenate(heads, -1)
    out_o = cat @ p["w_o"].reshape(H * d_model, -1) + p["b_o"]
    res1 = _layernorm(out_o, p["ln1_g"], p["ln1_b"]) + X
    hidden = _gelu(res1 @ p["w1"] + p["b1"])
    ff = hidden @ p["w2"] + p["b2"]
    return _layernorm(ff, p["ln2_g"], p["ln2_b"]) + res1


# ------------------------------------ main --------------------------------------

if __name__ == "__main__":
    num_nodes, time_length = 8, 7           # X feature dim = time_length + 1 = 8
    d_model, num_heads, lam, d_ff = 16, 2, 0.5, 32
    # nn.Dropout(dropout) is defined in the module but never applied in forward.
    bs = 2
    D = time_length + 1

    kx, ka, kp = jax.random.split(jax.random.PRNGKey(0), 3)
    X = jax.random.normal(kx, (bs, num_nodes, D), jnp.float32)
    A_spat = jax.random.normal(ka, (bs, num_nodes, num_nodes), jnp.float32)
    params = init_svgt_params(kp, D, d_model, d_ff, num_heads)

    fwd = jax.jit(partial(svgtformer, num_heads=num_heads, d_model=d_model, lam=lam))
    out = jax.block_until_ready(fwd(X, A_spat, params))
    assert out.shape == (bs, num_nodes, D) and out.dtype == jnp.float32

    ref = svgtformer_ref(X, A_spat, params, num_heads=num_heads,
                         d_model=d_model, lam=lam)
    max_err = float(jnp.max(jnp.abs(out - ref)))
    assert max_err < 1e-3, f"kernel/reference mismatch: {max_err}"
    print("KERNEL_OK")
</pallas_src>

<mosaic_0001>
module attributes {stable_mosaic.version = 11 : i64} {
  func.func @_svgt_kernel(%arg0: i32, %arg1: memref<1x8x8xf32, #tpu.memory_space<vmem>>, %arg2: memref<1x8x8xf32, #tpu.memory_space<vmem>>, %arg3: memref<6x8x16xf32, #tpu.memory_space<vmem>>, %arg4: memref<6x1x16xf32, #tpu.memory_space<vmem>>, %arg5: memref<2x16x8xf32, #tpu.memory_space<vmem>>, %arg6: memref<1x8xf32, #tpu.memory_space<vmem>>, %arg7: memref<1x8xf32, #tpu.memory_space<vmem>>, %arg8: memref<1x8xf32, #tpu.memory_space<vmem>>, %arg9: memref<1x8xf32, #tpu.memory_space<vmem>>, %arg10: memref<1x8xf32, #tpu.memory_space<vmem>>, %arg11: memref<8x32xf32, #tpu.memory_space<vmem>>, %arg12: memref<1x32xf32, #tpu.memory_space<vmem>>, %arg13: memref<32x8xf32, #tpu.memory_space<vmem>>, %arg14: memref<1x8xf32, #tpu.memory_space<vmem>>, %arg15: memref<1x8x8xf32, #tpu.memory_space<vmem>>) attributes {dimension_semantics = [#tpu.dimension_semantics<parallel>], iteration_bounds = array<i64: 2>, scalar_prefetch = 0 : i64, scratch_operands = 0 : i64, tpu.core_type = #tpu.core_type<tc>, window_params = [{transform_indices = @transform_0, window_bounds = array<i64: 1, 8, 8>}, {transform_indices = @transform_1, window_bounds = array<i64: 1, 8, 8>}, {pipeline_mode = #tpu.pipeline_mode<synchronous>, transform_indices = @transform_2, window_bounds = array<i64: 6, 8, 16>}, {pipeline_mode = #tpu.pipeline_mode<synchronous>, transform_indices = @transform_3, window_bounds = array<i64: 6, 1, 16>}, {pipeline_mode = #tpu.pipeline_mode<synchronous>, transform_indices = @transform_4, window_bounds = array<i64: 2, 16, 8>}, {pipeline_mode = #tpu.pipeline_mode<synchronous>, transform_indices = @transform_5, window_bounds = array<i64: 1, 8>}, {pipeline_mode = #tpu.pipeline_mode<synchronous>, transform_indices = @transform_6, window_bounds = array<i64: 1, 8>}, {pipeline_mode = #tpu.pipeline_mode<synchronous>, transform_indices = @transform_7, window_bounds = array<i64: 1, 8>}, {pipeline_mode = #tpu.pipeline_mode<synchronous>, transform_indices = @transform_8, window_bounds = array<i64: 1, 8>}, {pipeline_mode = #tpu.pipeline_mode<synchronous>, transform_indices = @transform_9, window_bounds = array<i64: 1, 8>}, {pipeline_mode = #tpu.pipeline_mode<synchronous>, transform_indices = @transform_10, window_bounds = array<i64: 8, 32>}, {pipeline_mode = #tpu.pipeline_mode<synchronous>, transform_indices = @transform_11, window_bounds = array<i64: 1, 32>}, {pipeline_mode = #tpu.pipeline_mode<synchronous>, transform_indices = @transform_12, window_bounds = array<i64: 32, 8>}, {pipeline_mode = #tpu.pipeline_mode<synchronous>, transform_indices = @transform_13, window_bounds = array<i64: 1, 8>}, {transform_indices = @transform_14, window_bounds = array<i64: 1, 8, 8>}]} {
    %c0 = arith.constant 0 : index
    %c0_0 = arith.constant 0 : index
    %c0_1 = arith.constant 0 : index
    %0 = vector.load %arg1[%c0, %c0_0, %c0_1] : memref<1x8x8xf32, #tpu.memory_space<vmem>>, vector<1x8x8xf32>
    %1 = vector.shape_cast %0 : vector<1x8x8xf32> to vector<8x8xf32>
    %c0_2 = arith.constant 0 : index
    %c0_3 = arith.constant 0 : index
    %c0_4 = arith.constant 0 : index
    %2 = vector.load %arg2[%c0_2, %c0_3, %c0_4] : memref<1x8x8xf32, #tpu.memory_space<vmem>>, vector<1x8x8xf32>
    %3 = vector.shape_cast %2 : vector<1x8x8xf32> to vector<8x8xf32>
    %cst = arith.constant 0.000000e+00 : f32
    %4 = vector.broadcast %cst : f32 to vector<8x8xf32>
    %5 = arith.maximumf %3, %4 : vector<8x8xf32>
    %cst_5 = arith.constant dense<0xFF800000> : vector<8xf32>
    %6 = vector.multi_reduction <maximumf>, %5, %cst_5 [1] : vector<8x8xf32> to vector<8xf32>
    %7 = vector.shape_cast %6 : vector<8xf32> to vector<8x1xf32>
    %8 = vector.broadcast %7 : vector<8x1xf32> to vector<8x8xf32>
    %9 = arith.subf %5, %8 : vector<8x8xf32>
    %10 = math.exp %9 : vector<8x8xf32>
    %cst_6 = arith.constant dense<0.000000e+00> : vector<8xf32>
    %11 = vector.multi_reduction <add>, %10, %cst_6 [1] : vector<8x8xf32> to vector<8xf32>
    %12 = vector.shape_cast %11 : vector<8xf32> to vector<8x1xf32>
    %13 = vector.broadcast %12 : vector<8x1xf32> to vector<8x8xf32>
    %14 = arith.divf %10, %13 : vector<8x8xf32>
    %15 = vector.shape_cast %1 : vector<8x8xf32> to vector<1x8x8xf32>
    %16 = vector.shape_cast %15 : vector<1x8x8xf32> to vector<1x8x8xf32>
    %17 = vector.broadcast %16 : vector<1x8x8xf32> to vector<6x8x8xf32>
    %c0_7 = arith.constant 0 : index
    %c0_8 = arith.constant 0 : index
    %c0_9 = arith.constant 0 : index
    %18 = vector.load %arg3[%c0_7, %c0_8, %c0_9] : memref<6x8x16xf32, #tpu.memory_space<vmem>>, vector<6x8x16xf32>
    "tpu.trace_start"() <{level = 10 : i32, message = "pnd,pdm->pnm"}> : () -> ()
    %cst_10 = arith.constant dense<0.000000e+00> : vector<6x8x16xf32>
    %19 = tpu.matmul %17, %18, %cst_10 {dimension_numbers = #tpu.dot_dimension_numbers<[2], [1], [1], [2], [0, 0, 0, 1, 1, 2], [0], [0]>} : vector<6x8x8xf32>, vector<6x8x16xf32>, vector<6x8x16xf32> -> vector<6x8x16xf32>
    "tpu.trace_stop"() : () -> ()
    %c0_11 = arith.constant 0 : index
    %c0_12 = arith.constant 0 : index
    %c0_13 = arith.constant 0 : index
    %20 = vector.load %arg4[%c0_11, %c0_12, %c0_13] : memref<6x1x16xf32, #tpu.memory_space<vmem>>, vector<6x1x16xf32>
    %21 = vector.broadcast %20 : vector<6x1x16xf32> to vector<6x8x16xf32>
    %22 = arith.addf %19, %21 : vector<6x8x16xf32>
    %23 = vector.extract_strided_slice %22 {offsets = [0, 0, 0], sizes = [2, 8, 16], strides = [1, 1, 1]} : vector<6x8x16xf32> to vector<2x8x16xf32>
    %24 = vector.extract_strided_slice %22 {offsets = [2, 0, 0], sizes = [2, 8, 16], strides = [1, 1, 1]} : vector<6x8x16xf32> to vector<2x8x16xf32>
    %25 = vector.extract_strided_slice %22 {offsets = [4, 0, 0], sizes = [2, 8, 16], strides = [1, 1, 1]} : vector<6x8x16xf32> to vector<2x8x16xf32>
    "tpu.trace_start"() <{level = 10 : i32, message = "hqd,hkd->hqk"}> : () -> ()
    %cst_14 = arith.constant dense<0.000000e+00> : vector<2x8x8xf32>
    %26 = tpu.matmul %23, %24, %cst_14 {dimension_numbers = #tpu.dot_dimension_numbers<[2], [2], [1], [1], [0, 0, 0, 1, 1, 1], [0], [0]>} : vector<2x8x16xf32>, vector<2x8x16xf32>, vector<2x8x8xf32> -> vector<2x8x8xf32>
    "tpu.trace_stop"() : () -> ()
    %cst_15 = arith.constant 2.500000e-01 : f32
    %27 = vector.broadcast %cst_15 : f32 to vector<2x8x8xf32>
    %28 = arith.mulf %26, %27 : vector<2x8x8xf32>
    %cst_16 = arith.constant dense<0xFF800000> : vector<2x8xf32>
    %29 = vector.multi_reduction <maximumf>, %28, %cst_16 [2] : vector<2x8x8xf32> to vector<2x8xf32>
    %30 = vector.shape_cast %29 : vector<2x8xf32> to vector<2x8x1xf32>
    %31 = vector.broadcast %30 : vector<2x8x1xf32> to vector<2x8x8xf32>
    %32 = arith.subf %28, %31 : vector<2x8x8xf32>
    %33 = math.exp %32 : vector<2x8x8xf32>
    %cst_17 = arith.constant dense<0.000000e+00> : vector<2x8xf32>
    %34 = vector.multi_reduction <add>, %33, %cst_17 [2] : vector<2x8x8xf32> to vector<2x8xf32>
    %35 = vector.shape_cast %34 : vector<2x8xf32> to vector<2x8x1xf32>
    %36 = vector.broadcast %35 : vector<2x8x1xf32> to vector<2x8x8xf32>
    %37 = arith.divf %33, %36 : vector<2x8x8xf32>
    %cst_18 = arith.constant 5.000000e-01 : f32
    %38 = vector.broadcast %cst_18 : f32 to vector<2x8x8xf32>
    %39 = arith.mulf %38, %37 : vector<2x8x8xf32>
    %40 = vector.shape_cast %14 : vector<8x8xf32> to vector<1x8x8xf32>
    %cst_19 = arith.constant 5.000000e-01 : f32
    %41 = vector.broadcast %cst_19 : f32 to vector<1x8x8xf32>
    %42 = arith.mulf %41, %40 : vector<1x8x8xf32>
    %43 = vector.broadcast %42 : vector<1x8x8xf32> to vector<2x8x8xf32>
    %44 = arith.addf %39, %43 : vector<2x8x8xf32>
    %cst_20 = arith.constant dense<0xFF800000> : vector<2x8xf32>
    %45 = vector.multi_reduction <maximumf>, %44, %cst_20 [2] : vector<2x8x8xf32> to vector<2x8xf32>
    %46 = vector.shape_cast %45 : vector<2x8xf32> to vector<2x8x1xf32>
    %47 = vector.broadcast %46 : vector<2x8x1xf32> to vector<2x8x8xf32>
    %48 = arith.subf %44, %47 : vector<2x8x8xf32>
    %49 = math.exp %48 : vector<2x8x8xf32>
    %cst_21 = arith.constant dense<0.000000e+00> : vector<2x8xf32>
    %50 = vector.multi_reduction <add>, %49, %cst_21 [2] : vector<2x8x8xf32> to vector<2x8xf32>
    %51 = vector.shape_cast %50 : vector<2x8xf32> to vector<2x8x1xf32>
    %52 = vector.broadcast %51 : vector<2x8x1xf32> to vector<2x8x8xf32>
    %53 = arith.divf %49, %52 : vector<2x8x8xf32>
    "tpu.trace_start"() <{level = 10 : i32, message = "hqk,hkd->hqd"}> : () -> ()
    %cst_22 = arith.constant dense<0.000000e+00> : vector<2x8x16xf32>
    %54 = tpu.matmul %53, %25, %cst_22 {dimension_numbers = #tpu.dot_dimension_numbers<[2], [1], [1], [2], [0, 0, 0, 1, 1, 2], [0], [0]>} : vector<2x8x8xf32>, vector<2x8x16xf32>, vector<2x8x16xf32> -> vector<2x8x16xf32>
    "tpu.trace_stop"() : () -> ()
    %c0_23 = arith.constant 0 : index
    %c0_24 = arith.constant 0 : index
    %c0_25 = arith.constant 0 : index
    %55 = vector.load %arg5[%c0_23, %c0_24, %c0_25] : memref<2x16x8xf32, #tpu.memory_space<vmem>>, vector<2x16x8xf32>
    "tpu.trace_start"() <{level = 10 : i32, message = "hnd,hdo->hno"}> : () -> ()
    %cst_26 = arith.constant dense<0.000000e+00> : vector<2x8x8xf32>
    %56 = tpu.matmul %54, %55, %cst_26 {dimension_numbers = #tpu.dot_dimension_numbers<[2], [1], [1], [2], [0, 0, 0, 1, 1, 2], [0], [0]>} : vector<2x8x16xf32>, vector<2x16x8xf32>, vector<2x8x8xf32> -> vector<2x8x8xf32>
    "tpu.trace_stop"() : () -> ()
    %cst_27 = arith.constant dense<0.000000e+00> : vector<8x8xf32>
    %57 = vector.multi_reduction <add>, %56, %cst_27 [0] : vector<2x8x8xf32> to vector<8x8xf32>
    %c0_28 = arith.constant 0 : index
    %c0_29 = arith.constant 0 : index
    %58 = vector.load %arg6[%c0_28, %c0_29] : memref<1x8xf32, #tpu.memory_space<vmem>>, vector<1x8xf32>
    %59 = vector.broadcast %58 : vector<1x8xf32> to vector<8x8xf32>
    %60 = arith.addf %57, %59 : vector<8x8xf32>
    %c0_30 = arith.constant 0 : index
    %c0_31 = arith.constant 0 : index
    %61 = vector.load %arg7[%c0_30, %c0_31] : memref<1x8xf32, #tpu.memory_space<vmem>>, vector<1x8xf32>
    %c0_32 = arith.constant 0 : index
    %c0_33 = arith.constant 0 : index
    %62 = vector.load %arg8[%c0_32, %c0_33] : memref<1x8xf32, #tpu.memory_space<vmem>>, vector<1x8xf32>
    %cst_34 = arith.constant dense<0.000000e+00> : vector<8xf32>
    %63 = vector.multi_reduction <add>, %60, %cst_34 [1] : vector<8x8xf32> to vector<8xf32>
    %64 = vector.shape_cast %63 : vector<8xf32> to vector<8x1xf32>
    %cst_35 = arith.constant 8.000000e+00 : f32
    %65 = vector.broadcast %cst_35 : f32 to vector<8x1xf32>
    %66 = arith.divf %64, %65 : vector<8x1xf32>
    %67 = vector.broadcast %66 : vector<8x1xf32> to vector<8x8xf32>
    %68 = arith.subf %60, %67 : vector<8x8xf32>
    %69 = arith.mulf %68, %68 : vector<8x8xf32>
    %cst_36 = arith.constant dense<0.000000e+00> : vector<8xf32>
    %70 = vector.multi_reduction <add>, %69, %cst_36 [1] : vector<8x8xf32> to vector<8xf32>
    %71 = vector.shape_cast %70 : vector<8xf32> to vector<8x1xf32>
    %cst_37 = arith.constant 8.000000e+00 : f32
    %72 = vector.broadcast %cst_37 : f32 to vector<8x1xf32>
    %73 = arith.divf %71, %72 : vector<8x1xf32>
    %74 = vector.broadcast %66 : vector<8x1xf32> to vector<8x8xf32>
    %75 = arith.subf %60, %74 : vector<8x8xf32>
    %cst_38 = arith.constant 9.99999974E-6 : f32
    %76 = vector.broadcast %cst_38 : f32 to vector<8x1xf32>
    %77 = arith.addf %73, %76 : vector<8x1xf32>
    %78 = math.rsqrt %77 : vector<8x1xf32>
    %79 = vector.broadcast %78 : vector<8x1xf32> to vector<8x8xf32>
    %80 = arith.mulf %75, %79 : vector<8x8xf32>
    %81 = vector.broadcast %61 : vector<1x8xf32> to vector<8x8xf32>
    %82 = arith.mulf %80, %81 : vector<8x8xf32>
    %83 = vector.broadcast %62 : vector<1x8xf32> to vector<8x8xf32>
    %84 = arith.addf %82, %83 : vector<8x8xf32>
    %85 = arith.addf %84, %1 : vector<8x8xf32>
    %c0_39 = arith.constant 0 : index
    %c0_40 = arith.constant 0 : index
    %86 = vector.load %arg11[%c0_39, %c0_40] : memref<8x32xf32, #tpu.memory_space<vmem>>, vector<8x32xf32>
    %cst_41 = arith.constant dense<0.000000e+00> : vector<8x32xf32>
    %87 = tpu.matmul %85, %86, %cst_41 {dimension_numbers = #tpu.dot_dimension_numbers<[1], [0], [0], [1], [0, 0, 1, 1], [], []>} : vector<8x8xf32>, vector<8x32xf32>, vector<8x32xf32> -> vector<8x32xf32>
    %c0_42 = arith.constant 0 : index
    %c0_43 = arith.constant 0 : index
    %88 = vector.load %arg12[%c0_42, %c0_43] : memref<1x32xf32, #tpu.memory_space<vmem>>, vector<1x32xf32>
    %89 = vector.broadcast %88 : vector<1x32xf32> to vector<8x32xf32>
    %90 = arith.addf %87, %89 : vector<8x32xf32>
    %cst_44 = arith.constant 5.000000e-01 : f32
    %91 = vector.broadcast %cst_44 : f32 to vector<8x32xf32>
    %92 = arith.mulf %91, %90 : vector<8x32xf32>
    %cst_45 = arith.constant 4.471500e-02 : f32
    %93 = vector.broadcast %cst_45 : f32 to vector<8x32xf32>
    %94 = arith.mulf %93, %90 : vector<8x32xf32>
    %95 = arith.mulf %94, %90 : vector<8x32xf32>
    %96 = arith.mulf %95, %90 : vector<8x32xf32>
    %97 = arith.addf %90, %96 : vector<8x32xf32>
    %cst_46 = arith.constant 0.797884583 : f32
    %98 = vector.broadcast %cst_46 : f32 to vector<8x32xf32>
    %99 = arith.mulf %98, %97 : vector<8x32xf32>
    %100 = math.tanh %99 : vector<8x32xf32>
    %cst_47 = arith.constant 1.000000e+00 : f32
    %101 = vector.broadcast %cst_47 : f32 to vector<8x32xf32>
    %102 = arith.addf %101, %100 : vector<8x32xf32>
    %103 = arith.mulf %92, %102 : vector<8x32xf32>
    %c0_48 = arith.constant 0 : index
    %c0_49 = arith.constant 0 : index
    %104 = vector.load %arg13[%c0_48, %c0_49] : memref<32x8xf32, #tpu.memory_space<vmem>>, vector<32x8xf32>
    %cst_50 = arith.constant dense<0.000000e+00> : vector<8x8xf32>
    %105 = tpu.matmul %103, %104, %cst_50 {dimension_numbers = #tpu.dot_dimension_numbers<[1], [0], [0], [1], [0, 0, 1, 1], [], []>} : vector<8x32xf32>, vector<32x8xf32>, vector<8x8xf32> -> vector<8x8xf32>
    %c0_51 = arith.constant 0 : index
    %c0_52 = arith.constant 0 : index
    %106 = vector.load %arg14[%c0_51, %c0_52] : memref<1x8xf32, #tpu.memory_space<vmem>>, vector<1x8xf32>
    %107 = vector.broadcast %106 : vector<1x8xf32> to vector<8x8xf32>
    %108 = arith.addf %105, %107 : vector<8x8xf32>
    %c0_53 = arith.constant 0 : index
    %c0_54 = arith.constant 0 : index
    %109 = vector.load %arg9[%c0_53, %c0_54] : memref<1x8xf32, #tpu.memory_space<vmem>>, vector<1x8xf32>
    %c0_55 = arith.constant 0 : index
    %c0_56 = arith.constant 0 : index
    %110 = vector.load %arg10[%c0_55, %c0_56] : memref<1x8xf32, #tpu.memory_space<vmem>>, vector<1x8xf32>
    %cst_57 = arith.constant dense<0.000000e+00> : vector<8xf32>
    %111 = vector.multi_reduction <add>, %108, %cst_57 [1] : vector<8x8xf32> to vector<8xf32>
    %112 = vector.shape_cast %111 : vector<8xf32> to vector<8x1xf32>
    %cst_58 = arith.constant 8.000000e+00 : f32
    %113 = vector.broadcast %cst_58 : f32 to vector<8x1xf32>
    %114 = arith.divf %112, %113 : vector<8x1xf32>
    %115 = vector.broadcast %114 : vector<8x1xf32> to vector<8x8xf32>
    %116 = arith.subf %108, %115 : vector<8x8xf32>
    %117 = arith.mulf %116, %116 : vector<8x8xf32>
    %cst_59 = arith.constant dense<0.000000e+00> : vector<8xf32>
    %118 = vector.multi_reduction <add>, %117, %cst_59 [1] : vector<8x8xf32> to vector<8xf32>
    %119 = vector.shape_cast %118 : vector<8xf32> to vector<8x1xf32>
    %cst_60 = arith.constant 8.000000e+00 : f32
    %120 = vector.broadcast %cst_60 : f32 to vector<8x1xf32>
    %121 = arith.divf %119, %120 : vector<8x1xf32>
    %122 = vector.broadcast %114 : vector<8x1xf32> to vector<8x8xf32>
    %123 = arith.subf %108, %122 : vector<8x8xf32>
    %cst_61 = arith.constant 9.99999974E-6 : f32
    %124 = vector.broadcast %cst_61 : f32 to vector<8x1xf32>
    %125 = arith.addf %121, %124 : vector<8x1xf32>
    %126 = math.rsqrt %125 : vector<8x1xf32>
    %127 = vector.broadcast %126 : vector<8x1xf32> to vector<8x8xf32>
    %128 = arith.mulf %123, %127 : vector<8x8xf32>
    %129 = vector.broadcast %109 : vector<1x8xf32> to vector<8x8xf32>
    %130 = arith.mulf %128, %129 : vector<8x8xf32>
    %131 = vector.broadcast %110 : vector<1x8xf32> to vector<8x8xf32>
    %132 = arith.addf %130, %131 : vector<8x8xf32>
    %133 = arith.addf %132, %85 : vector<8x8xf32>
    %c0_62 = arith.constant 0 : index
    %c0_63 = arith.constant 0 : index
    %c0_64 = arith.constant 0 : index
    %134 = vector.load %arg15[%c0_62, %c0_63, %c0_64] : memref<1x8x8xf32, #tpu.memory_space<vmem>>, vector<1x8x8xf32>
    %135 = vector.shape_cast %134 : vector<1x8x8xf32> to vector<8x8xf32>
    %136 = vector.shape_cast %133 : vector<8x8xf32> to vector<1x8x8xf32>
    tpu.vector_store %arg15[%c0_62, %c0_63, %c0_64], %136 {strides = array<i32>} : memref<1x8x8xf32, #tpu.memory_space<vmem>>, vector<1x8x8xf32>,
    return
  }
  func.func @transform_0(%arg0: i32) -> (i32, i32, i32) {
    %c0_i32 = arith.constant 0 : i32
    %c0_i32_0 = arith.constant 0 : i32
    %c0_i32_1 = arith.constant 0 : i32
    return %arg0, %c0_i32, %c0_i32_0 : i32, i32, i32
  }
  func.func @transform_1(%arg0: i32) -> (i32, i32, i32) {
    %c0_i32 = arith.constant 0 : i32
    %c0_i32_0 = arith.constant 0 : i32
    %c0_i32_1 = arith.constant 0 : i32
    return %arg0, %c0_i32, %c0_i32_0 : i32, i32, i32
  }
  func.func @transform_2(%arg0: i32) -> (i32, i32, i32) {
    %c0_i32 = arith.constant 0 : i32
    %c0_i32_0 = arith.constant 0 : i32
    %c0_i32_1 = arith.constant 0 : i32
    %c0_i32_2 = arith.constant 0 : i32
    return %c0_i32, %c0_i32_0, %c0_i32_1 : i32, i32, i32
  }
  func.func @transform_3(%arg0: i32) -> (i32, i32, i32) {
    %c0_i32 = arith.constant 0 : i32
    %c0_i32_0 = arith.constant 0 : i32
    %c0_i32_1 = arith.constant 0 : i32
    %c0_i32_2 = arith.constant 0 : i32
    return %c0_i32, %c0_i32_0, %c0_i32_1 : i32, i32, i32
  }
  func.func @transform_4(%arg0: i32) -> (i32, i32, i32) {
    %c0_i32 = arith.constant 0 : i32
    %c0_i32_0 = arith.constant 0 : i32
    %c0_i32_1 = arith.constant 0 : i32
    %c0_i32_2 = arith.constant 0 : i32
    return %c0_i32, %c0_i32_0, %c0_i32_1 : i32, i32, i32
  }
  func.func @transform_5(%arg0: i32) -> (i32, i32) {
    %c0_i32 = arith.constant 0 : i32
    %c0_i32_0 = arith.constant 0 : i32
    %c0_i32_1 = arith.constant 0 : i32
    return %c0_i32, %c0_i32_0 : i32, i32
  }
  func.func @transform_6(%arg0: i32) -> (i32, i32) {
    %c0_i32 = arith.constant 0 : i32
    %c0_i32_0 = arith.constant 0 : i32
    %c0_i32_1 = arith.constant 0 : i32
    return %c0_i32, %c0_i32_0 : i32, i32
  }
  func.func @transform_7(%arg0: i32) -> (i32, i32) {
    %c0_i32 = arith.constant 0 : i32
    %c0_i32_0 = arith.constant 0 : i32
    %c0_i32_1 = arith.constant 0 : i32
    return %c0_i32, %c0_i32_0 : i32, i32
  }
  func.func @transform_8(%arg0: i32) -> (i32, i32) {
    %c0_i32 = arith.constant 0 : i32
    %c0_i32_0 = arith.constant 0 : i32
    %c0_i32_1 = arith.constant 0 : i32
    return %c0_i32, %c0_i32_0 : i32, i32
  }
  func.func @transform_9(%arg0: i32) -> (i32, i32) {
    %c0_i32 = arith.constant 0 : i32
    %c0_i32_0 = arith.constant 0 : i32
    %c0_i32_1 = arith.constant 0 : i32
    return %c0_i32, %c0_i32_0 : i32, i32
  }
  func.func @transform_10(%arg0: i32) -> (i32, i32) {
    %c0_i32 = arith.constant 0 : i32
    %c0_i32_0 = arith.constant 0 : i32
    %c0_i32_1 = arith.constant 0 : i32
    return %c0_i32, %c0_i32_0 : i32, i32
  }
  func.func @transform_11(%arg0: i32) -> (i32, i32) {
    %c0_i32 = arith.constant 0 : i32
    %c0_i32_0 = arith.constant 0 : i32
    %c0_i32_1 = arith.constant 0 : i32
    return %c0_i32, %c0_i32_0 : i32, i32
  }
  func.func @transform_12(%arg0: i32) -> (i32, i32) {
    %c0_i32 = arith.constant 0 : i32
    %c0_i32_0 = arith.constant 0 : i32
    %c0_i32_1 = arith.constant 0 : i32
    return %c0_i32, %c0_i32_0 : i32, i32
  }
  func.func @transform_13(%arg0: i32) -> (i32, i32) {
    %c0_i32 = arith.constant 0 : i32
    %c0_i32_0 = arith.constant 0 : i32
    %c0_i32_1 = arith.constant 0 : i32
    return %c0_i32, %c0_i32_0 : i32, i32
  }
  func.func @transform_14(%arg0: i32) -> (i32, i32, i32) {
    %c0_i32 = arith.constant 0 : i32
    %c0_i32_0 = arith.constant 0 : i32
    %c0_i32_1 = arith.constant 0 : i32
    return %arg0, %c0_i32, %c0_i32_0 : i32, i32, i32
  }
}

</mosaic_0001>

<llo_original>
// kernel: svgtformer.1
$region0: #{svgtformer.1}
  #allocation0 [shape = 'u32[]', space=smem, size = 0x4, offset = 0x4, fixed_abs, tag = 'smem constant byte address 0x4 - core index']
  #allocation1 [shape = 'u32[144,128]{1,0:T(1,128)}', space=vmem, size = 0x12000, scoped, tag = 'internal scratch']
  %s0 = inlined_call_operand.vmem [shape: f32[2,8,8], index: 0, kind: input, shape index: {}]
  %s1 = inlined_call_operand.vmem [shape: f32[2,8,8], index: 1, kind: input, shape index: {}]
  %s2 = inlined_call_operand.vmem [shape: f32[6,8,16], index: 2, kind: input, shape index: {}]
  %s3 = inlined_call_operand.hbm [shape: f32[6,1,16], index: 3, kind: input, shape index: {}]
  %s4 = inlined_call_operand.vmem [shape: f32[2,16,8], index: 4, kind: input, shape index: {}]
  %s5 = inlined_call_operand.vmem [shape: f32[1,8], index: 5, kind: input, shape index: {}]
  %s6 = inlined_call_operand.vmem [shape: f32[1,8], index: 6, kind: input, shape index: {}]
  %s7 = inlined_call_operand.hbm [shape: f32[1,8], index: 7, kind: input, shape index: {}]
  %s8 = inlined_call_operand.vmem [shape: f32[1,8], index: 8, kind: input, shape index: {}]
  %s9 = inlined_call_operand.vmem [shape: f32[1,8], index: 9, kind: input, shape index: {}]
  %s10 = inlined_call_operand.vmem [shape: f32[8,32], index: 10, kind: input, shape index: {}]
  %s11 = inlined_call_operand.hbm [shape: f32[1,32], index: 11, kind: input, shape index: {}]
  %s12 = inlined_call_operand.vmem [shape: f32[32,8], index: 12, kind: input, shape index: {}]
  %s13 = inlined_call_operand.hbm [shape: f32[1,8], index: 13, kind: input, shape index: {}]
  %s14 = inlined_call_operand.hbm [shape: f32[2,8,8], index: 14, kind: output, shape index: {}]
  %s15 = sld [smem:[#allocation0]]
  $region105: #{svgtformer.1} parent=0
    _
  %s17 = ssub.s32 1, %s15
  %s18 = scalar_select 0, %s17, %s15
  $region1: #{svgtformer.1} parent=0
    #allocation2 [shape = 'u8[3072]{0}', space=vmem, size = 0xc00, scoped, tag = 'input window, operand 3, single buffered']
    #allocation3 [shape = 's32[2]{0}', space=sflag, size = 0x8, scoped, tag = 'scoped memory for svgtformer.1']
    #allocation4 [shape = 's32[2]{0}', space=sflag, size = 0x8, scoped, tag = 'scoped memory for svgtformer.1']
    #allocation5 [shape = 'u8[512]{0}', space=vmem, size = 0x400, scoped, tag = 'input window, operand 7, single buffered']
    #allocation6 [shape = 's32[1]{0}', space=sflag, size = 0x4, scoped, tag = 'scoped memory for svgtformer.1']
    #allocation7 [shape = 'u8[512]{0}', space=vmem, size = 0x400, scoped, tag = 'input window, operand 11, single buffered']
    #allocation8 [shape = 'u8[512]{0}', space=vmem, size = 0x400, scoped, tag = 'input window, operand 13, single buffered']
    #allocation9 [shape = 's32[1]{0}', space=sflag, size = 0x4, scoped, tag = 'scoped memory for svgtformer.1']
    #allocation10 [shape = 'u8[8192]{0}', space=vmem, size = 0x2000, scoped, tag = 'output window, operand 0']
    %19 = vsyncpa [#allocation3], 0
    %20 = vsyncpa [#allocation6], 0
    %21 = vsyncpa [#allocation9], 0
    %22 = vsyncpa [#allocation4], 0
    %s23 = scalar_lea.sflag [#allocation4], 1
    %24 = vsyncpa %s23, 0
    loop: start=0, step=1, limit=4
    $region2: #{svgtformer.1} parent=1 // loop_pre_header
      _
    $region3: #{svgtformer.1} parent=1 // loop_header
      %s26 = sphi 0, %s30
      %p27 = scmp.ge.s32.totalorder %s26, 4
      %s36 = sphi 0, %s38
      %s39 = sphi 0, %s36
      %s40 = sphi 0, %s39
      %s56 = sphi 0, %s40
      %s62 = sphi 0, %s64
      %s65 = sphi 0, %s62
      %s66 = sphi 0, %s65
      %s82 = sphi 0, %s66
      %s86 = sphi 0, %s86
      %s88 = sphi 0, %s86
      %s89 = sphi 0, %s88
      %s103 = sphi 0, %s89
      %s107 = sphi 0, %s107
      %s109 = sphi 0, %s107
      %s110 = sphi 0, %s109
      %s124 = sphi 0, %s110
      %s128 = sphi 0, %s128
      %s130 = sphi 0, %s128
      %s131 = sphi 0, %s130
      %s145 = sphi 0, %s131
      %s149 = sphi 0, %s149
      %s151 = sphi 0, %s149
      %s152 = sphi 0, %s151
      %s166 = sphi 0, %s152
      %s170 = sphi 0, %s170
      %s172 = sphi 0, %s170
      %s173 = sphi 0, %s172
      %s187 = sphi 0, %s173
      %s191 = sphi 0, %s191
      %s193 = sphi 0, %s191
      %s194 = sphi 0, %s193
      %s208 = sphi 0, %s194
      %s212 = sphi 0, %s212
      %s214 = sphi 0, %s212
      %s215 = sphi 0, %s214
      %s229 = sphi 0, %s215
      %s233 = sphi 0, %s233
      %s235 = sphi 0, %s233
      %s236 = sphi 0, %s235
      %s250 = sphi 0, %s236
      %s254 = sphi 0, %s254
      %s256 = sphi 0, %s254
      %s257 = sphi 0, %s256
      %s271 = sphi 0, %s257
      %s275 = sphi 0, %s275
      %s277 = sphi 0, %s275
      %s278 = sphi 0, %s277
      %s292 = sphi 0, %s278
      %s296 = sphi 0, %s296
      %s298 = sphi 0, %s296
      %s299 = sphi 0, %s298
      %s313 = sphi 0, %s299
      %s317 = sphi 0, %s317
      %s319 = sphi 0, %s317
      %s320 = sphi 0, %s319
      %s334 = sphi 0, %s320
      %s340 = sphi 0, %s342
      %s343 = sphi 0, %s340
      %s344 = sphi 0, %s343
      %s360 = sphi 0, %s344
    $region4: #{svgtformer.1} parent=1 // loop_header_branch
      %29 = sbr.rel (%p27) target = $region8
    $region5: #{svgtformer.1} parent=1 // loop_body
      %s31 = ssub.s32 %s26, 1
      %s32 = ssub.s32 %s26, 2
      %s33 = sadd.s32 %s26, 1
      %s34 = ssub.s32 %s26, %s33
      %p35 = scmp.eq.s32.totalorder %s34, 0
      %s37 = sadd.s32 %s36, 1
      %s38 = scalar_select %p35, %s36, %s37
      %p41 = pneg %p35
      %p42 = scmp.eq.s32.totalorder %s26, 1
      %p43 = por %p41, %p42
      %p44 = scmp.ne.s32.totalorder %s36, %s39
      %p45 = scmp.eq.s32.totalorder %s26, 0
      %p46 = por %p44, %p45
      %p47 = scmp.ne.s32.totalorder %s36, %s39
      %p48 = scmp.eq.s32.totalorder %s31, 1
      %p49 = por %p47, %p48
      %p50 = scmp.ne.s32.totalorder %s39, %s40
      %p51 = scmp.eq.s32.totalorder %s31, 0
      %p52 = por %p50, %p51
      %p53 = scmp.ne.s32.totalorder %s39, %s40
      %p54 = scmp.eq.s32.totalorder %s32, 1
      %p55 = por %p53, %p54
      %p57 = scmp.ne.s32.totalorder %s40, %s56
      %p58 = scmp.eq.s32.totalorder %s32, 0
      %p59 = por %p57, %p58
      %s60 = ssub.s32 %s26, %s33
      %p61 = scmp.eq.s32.totalorder %s60, 0
      %s63 = sadd.s32 %s62, 1
      %s64 = scalar_select %p61, %s62, %s63
      %p67 = pneg %p61
      %p68 = scmp.eq.s32.totalorder %s26, 1
      %p69 = por %p67, %p68
      %p70 = scmp.ne.s32.totalorder %s62, %s65
      %p71 = scmp.eq.s32.totalorder %s26, 0
      %p72 = por %p70, %p71
      %p73 = scmp.ne.s32.totalorder %s62, %s65
      %p74 = scmp.eq.s32.totalorder %s31, 1
      %p75 = por %p73, %p74
      %p76 = scmp.ne.s32.totalorder %s65, %s66
      %p77 = scmp.eq.s32.totalorder %s31, 0
      %p78 = por %p76, %p77
      %p79 = scmp.ne.s32.totalorder %s65, %s66
      %p80 = scmp.eq.s32.totalorder %s32, 1
      %p81 = por %p79, %p80
      %p83 = scmp.ne.s32.totalorder %s66, %s82
      %p84 = scmp.eq.s32.totalorder %s32, 0
      %p85 = por %p83, %p84
      %s87 = sadd.s32 %s86, 1
      %p90 = scmp.eq.s32.totalorder %s26, 1
      %p91 = scmp.ne.s32.totalorder %s86, %s88
      %p92 = scmp.eq.s32.totalorder %s26, 0
      %p93 = por %p91, %p92
      %p94 = scmp.ne.s32.totalorder %s86, %s88
      %p95 = scmp.eq.s32.totalorder %s31, 1
      %p96 = por %p94, %p95
      %p97 = scmp.ne.s32.totalorder %s88, %s89
      %p98 = scmp.eq.s32.totalorder %s31, 0
      %p99 = por %p97, %p98
      %p100 = scmp.ne.s32.totalorder %s88, %s89
      %p101 = scmp.eq.s32.totalorder %s32, 1
      %p102 = por %p100, %p101
      %p104 = scmp.ne.s32.totalorder %s89, %s103
      %p105 = scmp.eq.s32.totalorder %s32, 0
      %p106 = por %p104, %p105
      %s108 = sadd.s32 %s107, 1
      %p111 = scmp.eq.s32.totalorder %s26, 1
      %p112 = scmp.ne.s32.totalorder %s107, %s109
      %p113 = scmp.eq.s32.totalorder %s26, 0
      %p114 = por %p112, %p113
      %p115 = scmp.ne.s32.totalorder %s107, %s109
      %p116 = scmp.eq.s32.totalorder %s31, 1
      %p117 = por %p115, %p116
      %p118 = scmp.ne.s32.totalorder %s109, %s110
      %p119 = scmp.eq.s32.totalorder %s31, 0
      %p120 = por %p118, %p119
      %p121 = scmp.ne.s32.totalorder %s109, %s110
      %p122 = scmp.eq.s32.totalorder %s32, 1
      %p123 = por %p121, %p122
      %p125 = scmp.ne.s32.totalorder %s110, %s124
      %p126 = scmp.eq.s32.totalorder %s32, 0
      %p127 = por %p125, %p126
      %s129 = sadd.s32 %s128, 1
      %p132 = scmp.eq.s32.totalorder %s26, 1
      %p133 = scmp.ne.s32.totalorder %s128, %s130
      %p134 = scmp.eq.s32.totalorder %s26, 0
      %p135 = por %p133, %p134
      %p136 = scmp.ne.s32.totalorder %s128, %s130
      %p137 = scmp.eq.s32.totalorder %s31, 1
      %p138 = por %p136, %p137
      %p139 = scmp.ne.s32.totalorder %s130, %s131
      %p140 = scmp.eq.s32.totalorder %s31, 0
      %p141 = por %p139, %p140
      %p142 = scmp.ne.s32.totalorder %s130, %s131
      %p143 = scmp.eq.s32.totalorder %s32, 1
      %p144 = por %p142, %p143
      %p146 = scmp.ne.s32.totalorder %s131, %s145
      %p147 = scmp.eq.s32.totalorder %s32, 0
      %p148 = por %p146, %p147
      %s150 = sadd.s32 %s149, 1
      %p153 = scmp.eq.s32.totalorder %s26, 1
      %p154 = scmp.ne.s32.totalorder %s149, %s151
      %p155 = scmp.eq.s32.totalorder %s26, 0
      %p156 = por %p154, %p155
      %p157 = scmp.ne.s32.totalorder %s149, %s151
      %p158 = scmp.eq.s32.totalorder %s31, 1
      %p159 = por %p157, %p158
      %p160 = scmp.ne.s32.totalorder %s151, %s152
      %p161 = scmp.eq.s32.totalorder %s31, 0
      %p162 = por %p160, %p161
      %p163 = scmp.ne.s32.totalorder %s151, %s152
      %p164 = scmp.eq.s32.totalorder %s32, 1
      %p165 = por %p163, %p164
      %p167 = scmp.ne.s32.totalorder %s152, %s166
      %p168 = scmp.eq.s32.totalorder %s32, 0
      %p169 = por %p167, %p168
      %s171 = sadd.s32 %s170, 1
      %p174 = scmp.eq.s32.totalorder %s26, 1
      %p175 = scmp.ne.s32.totalorder %s170, %s172
      %p176 = scmp.eq.s32.totalorder %s26, 0
      %p177 = por %p175, %p176
      %p178 = scmp.ne.s32.totalorder %s170, %s172
      %p179 = scmp.eq.s32.totalorder %s31, 1
      %p180 = por %p178, %p179
      %p181 = scmp.ne.s32.totalorder %s172, %s173
      %p182 = scmp.eq.s32.totalorder %s31, 0
      %p183 = por %p181, %p182
      %p184 = scmp.ne.s32.totalorder %s172, %s173
      %p185 = scmp.eq.s32.totalorder %s32, 1
      %p186 = por %p184, %p185
      %p188 = scmp.ne.s32.totalorder %s173, %s187
      %p189 = scmp.eq.s32.totalorder %s32, 0
      %p190 = por %p188, %p189
      %s192 = sadd.s32 %s191, 1
      %p195 = scmp.eq.s32.totalorder %s26, 1
      %p196 = scmp.ne.s32.totalorder %s191, %s193
      %p197 = scmp.eq.s32.totalorder %s26, 0
      %p198 = por %p196, %p197
      %p199 = scmp.ne.s32.totalorder %s191, %s193
      %p200 = scmp.eq.s32.totalorder %s31, 1
      %p201 = por %p199, %p200
      %p202 = scmp.ne.s32.totalorder %s193, %s194
      %p203 = scmp.eq.s32.totalorder %s31, 0
      %p204 = por %p202, %p203
      %p205 = scmp.ne.s32.totalorder %s193, %s194
      %p206 = scmp.eq.s32.totalorder %s32, 1
      %p207 = por %p205, %p206
      %p209 = scmp.ne.s32.totalorder %s194, %s208
      %p210 = scmp.eq.s32.totalorder %s32, 0
      %p211 = por %p209, %p210
      %s213 = sadd.s32 %s212, 1
      %p216 = scmp.eq.s32.totalorder %s26, 1
      %p217 = scmp.ne.s32.totalorder %s212, %s214
      %p218 = scmp.eq.s32.totalorder %s26, 0
      %p219 = por %p217, %p218
      %p220 = scmp.ne.s32.totalorder %s212, %s214
      %p221 = scmp.eq.s32.totalorder %s31, 1
      %p222 = por %p220, %p221
      %p223 = scmp.ne.s32.totalorder %s214, %s215
      %p224 = scmp.eq.s32.totalorder %s31, 0
      %p225 = por %p223, %p224
      %p226 = scmp.ne.s32.totalorder %s214, %s215
      %p227 = scmp.eq.s32.totalorder %s32, 1
      %p228 = por %p226, %p227
      %p230 = scmp.ne.s32.totalorder %s215, %s229
      %p231 = scmp.eq.s32.totalorder %s32, 0
      %p232 = por %p230, %p231
      %s234 = sadd.s32 %s233, 1
      %p237 = scmp.eq.s32.totalorder %s26, 1
      %p238 = scmp.ne.s32.totalorder %s233, %s235
      %p239 = scmp.eq.s32.totalorder %s26, 0
      %p240 = por %p238, %p239
      %p241 = scmp.ne.s32.totalorder %s233, %s235
      %p242 = scmp.eq.s32.totalorder %s31, 1
      %p243 = por %p241, %p242
      %p244 = scmp.ne.s32.totalorder %s235, %s236
      %p245 = scmp.eq.s32.totalorder %s31, 0
      %p246 = por %p244, %p245
      %p247 = scmp.ne.s32.totalorder %s235, %s236
      %p248 = scmp.eq.s32.totalorder %s32, 1
      %p249 = por %p247, %p248
      %p251 = scmp.ne.s32.totalorder %s236, %s250
      %p252 = scmp.eq.s32.totalorder %s32, 0
      %p253 = por %p251, %p252
      %s255 = sadd.s32 %s254, 1
      %p258 = scmp.eq.s32.totalorder %s26, 1
      %p259 = scmp.ne.s32.totalorder %s254, %s256
      %p260 = scmp.eq.s32.totalorder %s26, 0
      %p261 = por %p259, %p260
      %p262 = scmp.ne.s32.totalorder %s254, %s256
      %p263 = scmp.eq.s32.totalorder %s31, 1
      %p264 = por %p262, %p263
      %p265 = scmp.ne.s32.totalorder %s256, %s257
      %p266 = scmp.eq.s32.totalorder %s31, 0
      %p267 = por %p265, %p266
      %p268 = scmp.ne.s32.totalorder %s256, %s257
      %p269 = scmp.eq.s32.totalorder %s32, 1
      %p270 = por %p268, %p269
      %p272 = scmp.ne.s32.totalorder %s257, %s271
      %p273 = scmp.eq.s32.totalorder %s32, 0
      %p274 = por %p272, %p273
      %s276 = sadd.s32 %s275, 1
      %p279 = scmp.eq.s32.totalorder %s26, 1
      %p280 = scmp.ne.s32.totalorder %s275, %s277
      %p281 = scmp.eq.s32.totalorder %s26, 0
      %p282 = por %p280, %p281
      %p283 = scmp.ne.s32.totalorder %s275, %s277
      %p284 = scmp.eq.s32.totalorder %s31, 1
      %p285 = por %p283, %p284
      %p286 = scmp.ne.s32.totalorder %s277, %s278
      %p287 = scmp.eq.s32.totalorder %s31, 0
      %p288 = por %p286, %p287
      %p289 = scmp.ne.s32.totalorder %s277, %s278
      %p290 = scmp.eq.s32.totalorder %s32, 1
      %p291 = por %p289, %p290
      %p293 = scmp.ne.s32.totalorder %s278, %s292
      %p294 = scmp.eq.s32.totalorder %s32, 0
      %p295 = por %p293, %p294
      %s297 = sadd.s32 %s296, 1
      %p300 = scmp.eq.s32.totalorder %s26, 1
      %p301 = scmp.ne.s32.totalorder %s296, %s298
      %p302 = scmp.eq.s32.totalorder %s26, 0
      %p303 = por %p301, %p302
      %p304 = scmp.ne.s32.totalorder %s296, %s298
      %p305 = scmp.eq.s32.totalorder %s31, 1
      %p306 = por %p304, %p305
      %p307 = scmp.ne.s32.totalorder %s298, %s299
      %p308 = scmp.eq.s32.totalorder %s31, 0
      %p309 = por %p307, %p308
      %p310 = scmp.ne.s32.totalorder %s298, %s299
      %p311 = scmp.eq.s32.totalorder %s32, 1
      %p312 = por %p310, %p311
      %p314 = scmp.ne.s32.totalorder %s299, %s313
      %p315 = scmp.eq.s32.totalorder %s32, 0
      %p316 = por %p314, %p315
      %s318 = sadd.s32 %s317, 1
      %p321 = scmp.eq.s32.totalorder %s26, 1
      %p322 = scmp.ne.s32.totalorder %s317, %s319
      %p323 = scmp.eq.s32.totalorder %s26, 0
      %p324 = por %p322, %p323
      %p325 = scmp.ne.s32.totalorder %s317, %s319
      %p326 = scmp.eq.s32.totalorder %s31, 1
      %p327 = por %p325, %p326
      %p328 = scmp.ne.s32.totalorder %s319, %s320
      %p329 = scmp.eq.s32.totalorder %s31, 0
      %p330 = por %p328, %p329
      %p331 = scmp.ne.s32.totalorder %s319, %s320
      %p332 = scmp.eq.s32.totalorder %s32, 1
      %p333 = por %p331, %p332
      %p335 = scmp.ne.s32.totalorder %s320, %s334
      %p336 = scmp.eq.s32.totalorder %s32, 0
      %p337 = por %p335, %p336
      %s338 = ssub.s32 %s26, %s33
      %p339 = scmp.eq.s32.totalorder %s338, 0
      %s341 = sadd.s32 %s340, 1
      %s342 = scalar_select %p339, %s340, %s341
      %p345 = pneg %p339
      %p346 = scmp.eq.s32.totalorder %s26, 1
      %p347 = por %p345, %p346
      %p348 = scmp.ne.s32.totalorder %s340, %s343
      %p349 = scmp.eq.s32.totalorder %s26, 0
      %p350 = por %p348, %p349
      %p351 = scmp.ne.s32.totalorder %s340, %s343
      %p352 = scmp.eq.s32.totalorder %s31, 1
      %p353 = por %p351, %p352
      %p354 = scmp.ne.s32.totalorder %s343, %s344
      %p355 = scmp.eq.s32.totalorder %s31, 0
      %p356 = por %p354, %p355
      %p357 = scmp.ne.s32.totalorder %s343, %s344
      %p358 = scmp.eq.s32.totalorder %s32, 1
      %p359 = por %p357, %p358
      %p361 = scmp.ne.s32.totalorder %s344, %s360
      %p362 = scmp.eq.s32.totalorder %s32, 0
      %p363 = por %p361, %p362
      %p364 = scmp.le.s32.totalorder 1, %s26
      %p365 = scmp.lt.s32.totalorder %s26, 3
      %p366 = pnand %p364, %p365
      %p367 = pneg %p366
      // Predicated region
      $region9: #{svgtformer.1} parent=5 // pred_check
        _
      $region10: #{svgtformer.1} parent=5 // pred_check_branch
        %369 = sbr.rel (%p366) target = $region12
      $region11: #{svgtformer.1} parent=5 // pred_region
        %s370 = ssub.s32 %s26, 1
        // Predicated region
        $region13: #{svgtformer.1} parent=11 // pred_check
          %p371 = pneg %p99
        $region14: #{svgtformer.1} parent=11 // pred_check_branch
          %373 = sbr.rel (%p371) target = $region16
        $region15: #{svgtformer.1} parent=11 // pred_region
          _
        $region16: #{svgtformer.1} parent=11 // pred_fallthru
          _
        // Predicated region
        $region17: #{svgtformer.1} parent=11 // pred_check
          %p374 = pneg %p120
        $region18: #{svgtformer.1} parent=11 // pred_check_branch
          %376 = sbr.rel (%p374) target = $region20
        $region19: #{svgtformer.1} parent=11 // pred_region
          %s378 = ssub.s32 96, 96
          %379 = vsyncadd [#allocation3], %s378
          %s380 = sshll.u32 [#allocation2], 4
          %s381 = int_to_ptr.vmem [resolvable:$true] %s380
          %386 = dma.hbm_to_vmem [thread:$0]  %s3, 96, %s381, [#allocation3], 16, 16, 1
        $region20: #{svgtformer.1} parent=11 // pred_fallthru
          _
        // Predicated region
        $region21: #{svgtformer.1} parent=11 // pred_check
          %p387 = pneg %p141
        $region22: #{svgtformer.1} parent=11 // pred_check_branch
          %389 = sbr.rel (%p387) target = $region24
        $region23: #{svgtformer.1} parent=11 // pred_region
          _
        $region24: #{svgtformer.1} parent=11 // pred_fallthru
          _
        // Predicated region
        $region25: #{svgtformer.1} parent=11 // pred_check
          %p390 = pneg %p162
        $region26: #{svgtformer.1} parent=11 // pred_check_branch
          %392 = sbr.rel (%p390) target = $region28
        $region27: #{svgtformer.1} parent=11 // pred_region
          _
        $region28: #{svgtformer.1} parent=11 // pred_fallthru
          _
        // Predicated region
        $region29: #{svgtformer.1} parent=11 // pred_check
          %p393 = pneg %p183
        $region30: #{svgtformer.1} parent=11 // pred_check_branch
          %395 = sbr.rel (%p393) target = $region32
        $region31: #{svgtformer.1} parent=11 // pred_region
          _
        $region32: #{svgtformer.1} parent=11 // pred_fallthru
          _
        // Predicated region
        $region33: #{svgtformer.1} parent=11 // pred_check
          %p396 = pneg %p204
        $region34: #{svgtformer.1} parent=11 // pred_check_branch
          %398 = sbr.rel (%p396) target = $region36
        $region35: #{svgtformer.1} parent=11 // pred_region
          %s400 = ssub.s32 16, 16
          %401 = vsyncadd [#allocation6], %s400
          %s403 = sshll.u32 [#allocation5], 4
          %s404 = int_to_ptr.vmem [resolvable:$true] %s403
          %406 = dma.hbm_to_vmem [thread:$0]  %s7, 16, %s404, [#allocation6]
        $region36: #{svgtformer.1} parent=11 // pred_fallthru
          _
        // Predicated region
        $region37: #{svgtformer.1} parent=11 // pred_check
          %p407 = pneg %p225
        $region38: #{svgtformer.1} parent=11 // pred_check_branch
          %409 = sbr.rel (%p407) target = $region40
        $region39: #{svgtformer.1} parent=11 // pred_region
          _
        $region40: #{svgtformer.1} parent=11 // pred_fallthru
          _
        // Predicated region
        $region41: #{svgtformer.1} parent=11 // pred_check
          %p410 = pneg %p246
        $region42: #{svgtformer.1} parent=11 // pred_check_branch
          %412 = sbr.rel (%p410) target = $region44
        $region43: #{svgtformer.1} parent=11 // pred_region
          _
        $region44: #{svgtformer.1} parent=11 // pred_fallthru
          _
        // Predicated region
        $region45: #{svgtformer.1} parent=11 // pred_check
          %p413 = pneg %p267
        $region46: #{svgtformer.1} parent=11 // pred_check_branch
          %415 = sbr.rel (%p413) target = $region48
        $region47: #{svgtformer.1} parent=11 // pred_region
          _
        $region48: #{svgtformer.1} parent=11 // pred_fallthru
          _
        // Predicated region
        $region49: #{svgtformer.1} parent=11 // pred_check
          %p416 = pneg %p288
        $region50: #{svgtformer.1} parent=11 // pred_check_branch
          %418 = sbr.rel (%p416) target = $region52
        $region51: #{svgtformer.1} parent=11 // pred_region
          %s420 = ssub.s32 16, 16
          %421 = vsyncadd [#allocation6], %s420
          %s423 = sshll.u32 [#allocation7], 4
          %s424 = int_to_ptr.vmem [resolvable:$true] %s423
          %426 = dma.hbm_to_vmem [thread:$0]  %s11, 16, %s424, [#allocation6]
        $region52: #{svgtformer.1} parent=11 // pred_fallthru
          _
        // Predicated region
        $region53: #{svgtformer.1} parent=11 // pred_check
          %p427 = pneg %p309
        $region54: #{svgtformer.1} parent=11 // pred_check_branch
          %429 = sbr.rel (%p427) target = $region56
        $region55: #{svgtformer.1} parent=11 // pred_region
          _
        $region56: #{svgtformer.1} parent=11 // pred_fallthru
          _
        // Predicated region
        $region57: #{svgtformer.1} parent=11 // pred_check
          %p430 = pneg %p330
        $region58: #{svgtformer.1} parent=11 // pred_check_branch
          %432 = sbr.rel (%p430) target = $region60
        $region59: #{svgtformer.1} parent=11 // pred_region
          %s434 = ssub.s32 16, 16
          %435 = vsyncadd [#allocation9], %s434
          %s437 = sshll.u32 [#allocation8], 4
          %s438 = int_to_ptr.vmem [resolvable:$true] %s437
          %440 = dma.hbm_to_vmem [thread:$0]  %s13, 16, %s438, [#allocation9]
        $region60: #{svgtformer.1} parent=11 // pred_fallthru
          _
      $region12: #{svgtformer.1} parent=5 // pred_fallthru
        _
      %p441 = scmp.lt.s32.totalorder %s26, 2
      // Predicated region
      $region61: #{svgtformer.1} parent=5 // pred_check
        %p442 = pneg %p441
      $region62: #{svgtformer.1} parent=5 // pred_check_branch
        %444 = sbr.rel (%p442) target = $region64
      $region63: #{svgtformer.1} parent=5 // pred_region
        // Predicated region
        $region65: #{svgtformer.1} parent=63 // pred_check
          %p445 = pneg %p46
        $region66: #{svgtformer.1} parent=63 // pred_check_branch
          %447 = sbr.rel (%p445) target = $region68
        $region67: #{svgtformer.1} parent=63 // pred_region
          %p448 = scmp.lt.s32.totalorder %s26, 1
          %s449 = scalar_select %p448, %s26, 1
          %s450 = smul.addr %s449, 8
          %s451 = scalar_lea.vmem %s0, %s450
        $region68: #{svgtformer.1} parent=63 // pred_fallthru
          _
        // Predicated region
        $region69: #{svgtformer.1} parent=63 // pred_check
          %p452 = pneg %p72
        $region70: #{svgtformer.1} parent=63 // pred_check_branch
          %454 = sbr.rel (%p452) target = $region72
        $region71: #{svgtformer.1} parent=63 // pred_region
          %p455 = scmp.lt.s32.totalorder %s26, 1
          %s456 = scalar_select %p455, %s26, 1
          %s457 = smul.addr %s456, 8
          %s458 = scalar_lea.vmem %s1, %s457
        $region72: #{svgtformer.1} parent=63 // pred_fallthru
          _
      $region64: #{svgtformer.1} parent=5 // pred_fallthru
        _
      %p459 = scmp.le.s32.totalorder 1, %s26
      %p460 = scmp.lt.s32.totalorder %s26, 3
      %p461 = pnand %p459, %p460
      %p462 = pneg %p461
      // Predicated region
      $region73: #{svgtformer.1} parent=5 // pred_check
        _
      $region74: #{svgtformer.1} parent=5 // pred_check_branch
        %464 = sbr.rel (%p461) target = $region76
      $region75: #{svgtformer.1} parent=5 // pred_region
        %s465 = ssub.s32 %s26, 1
        // Predicated region
        $region77: #{svgtformer.1} parent=75 // pred_check
          %p466 = pneg %p120
        $region78: #{svgtformer.1} parent=75 // pred_check_branch
          %468 = sbr.rel (%p466) target = $region80
        $region79: #{svgtformer.1} parent=75 // pred_region
          %469 = dma.done [#allocation3], 96
        $region80: #{svgtformer.1} parent=75 // pred_fallthru
          _
        // Predicated region
        $region81: #{svgtformer.1} parent=75 // pred_check
          %p470 = pneg %p204
        $region82: #{svgtformer.1} parent=75 // pred_check_branch
          %472 = sbr.rel (%p470) target = $region84
        $region83: #{svgtformer.1} parent=75 // pred_region
          %473 = dma.done [#allocation6], 16
        $region84: #{svgtformer.1} parent=75 // pred_fallthru
          _
        // Predicated region
        $region85: #{svgtformer.1} parent=75 // pred_check
          %p474 = pneg %p288
        $region86: #{svgtformer.1} parent=75 // pred_check_branch
          %476 = sbr.rel (%p474) target = $region88
        $region87: #{svgtformer.1} parent=75 // pred_region
          %477 = dma.done [#allocation6], 16
        $region88: #{svgtformer.1} parent=75 // pred_fallthru
          _
        // Predicated region
        $region89: #{svgtformer.1} parent=75 // pred_check
          %p478 = pneg %p330
        $region90: #{svgtformer.1} parent=75 // pred_check_branch
          %480 = sbr.rel (%p478) target = $region92
        $region91: #{svgtformer.1} parent=75 // pred_region
          %481 = dma.done [#allocation9], 16
        $region92: #{svgtformer.1} parent=75 // pred_fallthru
          _
        %p482 = scmp.lt.s32.totalorder %s31, 1
        %s483 = scalar_select %p482, %s31, 1
        %s484 = smul.addr %s483, 8
        %s485 = scalar_lea.vmem %s0, %s484
        %p486 = pneg %p52
        %p487 = pneg %p49
        %p488 = scmp.lt.s32.totalorder %s31, 1
        %s489 = scalar_select %p488, %s31, 1
        %s490 = smul.addr %s489, 8
        %s491 = scalar_lea.vmem %s1, %s490
        %p492 = pneg %p78
        %p493 = pneg %p75
        %p494 = pneg %p99
        %p495 = pneg %p96
        %p496 = pneg %p120
        %p497 = pneg %p117
        %p498 = pneg %p141
        %p499 = pneg %p138
        %p500 = pneg %p162
        %p501 = pneg %p159
        %p502 = pneg %p183
        %p503 = pneg %p180
        %p504 = pneg %p204
        %p505 = pneg %p201
        %p506 = pneg %p225
        %p507 = pneg %p222
        %p508 = pneg %p246
        %p509 = pneg %p243
        %p510 = pneg %p267
        %p511 = pneg %p264
        %p512 = pneg %p288
        %p513 = pneg %p285
        %p514 = pneg %p309
        %p515 = pneg %p306
        %p516 = pneg %p330
        %p517 = pneg %p327
        %p518 = pneg %p356
        %p519 = pneg %p353
        %s520 = sand.u32 %s343, 1
        %s521 = scalar_lea.sflag [#allocation4], %s520
        %s522 = sand.u32 %s343, 1
        %s523 = smul.addr %s522, 8
        %s524 = scalar_lea.vmem [#allocation10], %s523
        %p525 = scmp.lt.s32.totalorder %s31, 1
        %s526 = scalar_select %p525, %s31, 1
        %s527 = smul.addr %s526, 8
        %s528 = scalar_lea.vmem %s0, %s527
        %p529 = scmp.lt.s32.totalorder %s31, 1
        %s530 = scalar_select %p529, %s31, 1
        %s531 = smul.addr %s530, 8
        %s532 = scalar_lea.vmem %s1, %s531
        %v533 = vld [vmem:[%s528] sm:$0xff]
        %v534 = vld [vmem:[%s532] sm:$0xff]
        %v535 = vmax.f32 %v534, 0.0
        %vm536 = vcmask 64512
        %v537 = vsel %vm536, %v535, -inf
        %538 = vmax.xlane.f32.xlu0 %v537
        %v539 = vpop.xlane.xlu0 %538
        %v540 = vsub.f32 %v535, %v539
        %v541 = vmul.f32 %v540, 1.442695
        %v542 = vpow.pop %v541
        %v543 = vsel %vm536, %v542, 0.0
        %544 = vadd.xlane.f32.xlu0 %v543
        %v545 = vpop.xlane.xlu0 %544
        %v546 = vrcp.pop %v545
        %v547 = vmul.f32 %v542, %v546
        %v548 = vld [vmem:[%s2] sm:$0xff]
        %v549 = vld [vmem:[%s2 + $0x8] sm:$0xff]
        %v550 = vld [vmem:[%s2 + $0x10] sm:$0xff]
        %v551 = vld [vmem:[%s2 + $0x18] sm:$0xff]
        %v552 = vld [vmem:[%s2 + $0x20] sm:$0xff]
        %v553 = vld [vmem:[%s2 + $0x28] sm:$0xff]
        %v554 = vld [vmem:[#allocation2] sm:$0x1]
        %v555 = vld [vmem:[#allocation2 + $0x1] sm:$0x1]
        %v556 = vld [vmem:[#allocation2 + $0x2] sm:$0x1]
        %v557 = vld [vmem:[#allocation2 + $0x3] sm:$0x1]
        %v558 = vld [vmem:[#allocation2 + $0x4] sm:$0x1]
        %v559 = vld [vmem:[#allocation2 + $0x5] sm:$0x1]
        %v566 = vlaneseq
        %v567 = vshrl.u32 %v566, 7
        %v568 = vsub.s32 0, %v567
        %v569 = vrot.slane %v554, %v568
        %v570 = vlaneseq
        %v571 = vshrl.u32 %v570, 7
        %v572 = vsub.s32 0, %v571
        %v573 = vrot.slane %v555, %v572
        %v574 = vlaneseq
        %v575 = vshrl.u32 %v574, 7
        %v576 = vsub.s32 0, %v575
        %v577 = vrot.slane %v556, %v576
        %v578 = vlaneseq
        %v579 = vshrl.u32 %v578, 7
        %v580 = vsub.s32 0, %v579
        %v581 = vrot.slane %v557, %v580
        %v582 = vlaneseq
        %v583 = vshrl.u32 %v582, 7
        %v584 = vsub.s32 0, %v583
        %v585 = vrot.slane %v558, %v584
        %v586 = vlaneseq
        %v587 = vshrl.u32 %v586, 7
        %v588 = vsub.s32 0, %v587
        %v589 = vrot.slane %v559, %v588
        %v597 = vsel %vm536, %v533, 0
        %599 = vmatprep.subr.mxu0 0.0
        %600 = vmatpush1.msra.mxu0 %v548
        %601 = vmatprep.subr.mxu0 0.0
        %602 = vmatpush1.msra.mxu0 0.0
        %603 = vmatprep.subr.mxu0 0.0
        %604 = vmatpush1.msra.mxu0 0.0
        %605 = vmatprep.subr.mxu0 0.0
        %606 = vmatpush1.msra.mxu0 0.0
        %607 = vmatprep.subr.mxu0 0.0
        %608 = vmatpush1.msra.mxu0 0.0
        %609 = vmatprep.subr.mxu0 0.0
        %610 = vmatpush1.msra.mxu0 0.0
        %611 = vmatprep.subr.mxu0 0.0
        %612 = vmatpush1.msra.mxu0 0.0
        %613 = vmatprep.subr.mxu0 0.0
        %614 = vmatpush1.msra.mxu0 0.0
        %615 = vmatprep.subr.mxu0 0.0
        %616 = vmatpush1.msra.mxu0 0.0
        %617 = vmatprep.subr.mxu0 0.0
        %618 = vmatpush1.msra.mxu0 0.0
        %619 = vmatprep.subr.mxu0 0.0
        %620 = vmatpush1.msra.mxu0 0.0
        %621 = vmatprep.subr.mxu0 0.0
        %622 = vmatpush1.msra.mxu0 0.0
        %623 = vmatprep.subr.mxu0 0.0
        %624 = vmatpush1.msra.mxu0 0.0
        %625 = vmatprep.subr.mxu0 0.0
        %626 = vmatpush1.msra.mxu0 0.0
        %627 = vmatprep.subr.mxu0 0.0
        %628 = vmatpush1.msra.mxu0 0.0
        %629 = vmatprep.subr.mxu0 0.0
        %630 = vmatpush1.msra.mxu0 0.0
        %631 = vmatprep.subr.mxu0 0.0
        %632 = vmatpush1.msra.mxu0 0.0
        %633 = vmatprep.subr.mxu0 0.0
        %634 = vmatpush1.msra.mxu0 0.0
        %635 = vmatprep.subr.mxu0 0.0
        %636 = vmatpush1.msra.mxu0 0.0
        %637 = vmatprep.subr.mxu0 0.0
        %638 = vmatpush1.msra.mxu0 0.0
        %639 = vmatprep.subr.mxu0 0.0
        %640 = vmatpush1.msra.mxu0 0.0
        %641 = vmatprep.subr.mxu0 0.0
        %642 = vmatpush1.msra.mxu0 0.0
        %643 = vmatprep.subr.mxu0 0.0
        %644 = vmatpush1.msra.mxu0 0.0
        %645 = vmatprep.subr.mxu0 0.0
        %646 = vmatpush1.msra.mxu0 0.0
        %647 = vmatprep.subr.mxu0 0.0
        %648 = vmatpush1.msra.mxu0 0.0
        %649 = vmatprep.subr.mxu0 0.0
        %650 = vmatpush1.msra.mxu0 0.0
        %651 = vmatprep.subr.mxu0 0.0
        %652 = vmatpush1.msra.mxu0 0.0
        %653 = vmatprep.subr.mxu0 0.0
        %654 = vmatpush1.msra.mxu0 0.0
        %655 = vmatprep.subr.mxu0 0.0
        %656 = vmatpush1.msra.mxu0 0.0
        %657 = vmatprep.subr.mxu0 0.0
        %658 = vmatpush1.msra.mxu0 0.0
        %659 = vmatprep.subr.mxu0 0.0
        %660 = vmatpush1.msra.mxu0 0.0
        %661 = vmatprep.subr.mxu0 0.0
        %662 = vmatpush1.msra.mxu0 0.0
        %663 = vmatprep.mubr.f32.mxu0 0.0
        %664 = vmatmul.mubr.f32.gmra.mrb[0].mxu0 %v597
        %v665 = vpop.f32.mrb[0].mxu0
        %v666 = vadd.f32 %v569, %v665
        %v667 = vpop.f32.mrb[0].mxu0
        %668 = vdwg.mxu0
        %669 = vmatprep.subr.mxu0 0.0
        %670 = vmatpush1.msra.mxu0 %v549
        %671 = vmatprep.subr.mxu0 0.0
        %672 = vmatpush1.msra.mxu0 0.0
        %673 = vmatprep.subr.mxu0 0.0
        %674 = vmatpush1.msra.mxu0 0.0
        %675 = vmatprep.subr.mxu0 0.0
        %676 = vmatpush1.msra.mxu0 0.0
        %677 = vmatprep.subr.mxu0 0.0
        %678 = vmatpush1.msra.mxu0 0.0
        %679 = vmatprep.subr.mxu0 0.0
        %680 = vmatpush1.msra.mxu0 0.0
        %681 = vmatprep.subr.mxu0 0.0
        %682 = vmatpush1.msra.mxu0 0.0
        %683 = vmatprep.subr.mxu0 0.0
        %684 = vmatpush1.msra.mxu0 0.0
        %685 = vmatprep.subr.mxu0 0.0
        %686 = vmatpush1.msra.mxu0 0.0
        %687 = vmatprep.subr.mxu0 0.0
        %688 = vmatpush1.msra.mxu0 0.0
        %689 = vmatprep.subr.mxu0 0.0
        %690 = vmatpush1.msra.mxu0 0.0
        %691 = vmatprep.subr.mxu0 0.0
        %692 = vmatpush1.msra.mxu0 0.0
        %693 = vmatprep.subr.mxu0 0.0
        %694 = vmatpush1.msra.mxu0 0.0
        %695 = vmatprep.subr.mxu0 0.0
        %696 = vmatpush1.msra.mxu0 0.0
        %697 = vmatprep.subr.mxu0 0.0
        %698 = vmatpush1.msra.mxu0 0.0
        %699 = vmatprep.subr.mxu0 0.0
        %700 = vmatpush1.msra.mxu0 0.0
        %701 = vmatprep.subr.mxu0 0.0
        %702 = vmatpush1.msra.mxu0 0.0
        %703 = vmatprep.subr.mxu0 0.0
        %704 = vmatpush1.msra.mxu0 0.0
        %705 = vmatprep.subr.mxu0 0.0
        %706 = vmatpush1.msra.mxu0 0.0
        %707 = vmatprep.subr.mxu0 0.0
        %708 = vmatpush1.msra.mxu0 0.0
        %709 = vmatprep.subr.mxu0 0.0
        %710 = vmatpush1.msra.mxu0 0.0
        %711 = vmatprep.subr.mxu0 0.0
        %712 = vmatpush1.msra.mxu0 0.0
        %713 = vmatprep.subr.mxu0 0.0
        %714 = vmatpush1.msra.mxu0 0.0
        %715 = vmatprep.subr.mxu0 0.0
        %716 = vmatpush1.msra.mxu0 0.0
        %717 = vmatprep.subr.mxu0 0.0
        %718 = vmatpush1.msra.mxu0 0.0
        %719 = vmatprep.subr.mxu0 0.0
        %720 = vmatpush1.msra.mxu0 0.0
        %721 = vmatprep.subr.mxu0 0.0
        %722 = vmatpush1.msra.mxu0 0.0
        %723 = vmatprep.subr.mxu0 0.0
        %724 = vmatpush1.msra.mxu0 0.0
        %725 = vmatprep.subr.mxu0 0.0
        %726 = vmatpush1.msra.mxu0 0.0
        %727 = vmatprep.subr.mxu0 0.0
        %728 = vmatpush1.msra.mxu0 0.0
        %729 = vmatprep.subr.mxu0 0.0
        %730 = vmatpush1.msra.mxu0 0.0
        %731 = vmatprep.subr.mxu0 0.0
        %732 = vmatpush1.msra.mxu0 0.0
        %733 = vmatprep.mubr.f32.mxu0 0.0
        %734 = vmatmul.mubr.f32.gmra.mrb[0].mxu0 %v597
        %v735 = vpop.f32.mrb[0].mxu0
        %v736 = vadd.f32 %v573, %v735
        %v737 = vpop.f32.mrb[0].mxu0
        %738 = vdwg.mxu0
        %739 = vmatprep.subr.mxu0 0.0
        %740 = vmatpush1.msra.mxu0 %v550
        %741 = vmatprep.subr.mxu0 0.0
        %742 = vmatpush1.msra.mxu0 0.0
        %743 = vmatprep.subr.mxu0 0.0
        %744 = vmatpush1.msra.mxu0 0.0
        %745 = vmatprep.subr.mxu0 0.0
        %746 = vmatpush1.msra.mxu0 0.0
        %747 = vmatprep.subr.mxu0 0.0
        %748 = vmatpush1.msra.mxu0 0.0
        %749 = vmatprep.subr.mxu0 0.0
        %750 = vmatpush1.msra.mxu0 0.0
        %751 = vmatprep.subr.mxu0 0.0
        %752 = vmatpush1.msra.mxu0 0.0
        %753 = vmatprep.subr.mxu0 0.0
        %754 = vmatpush1.msra.mxu0 0.0
        %755 = vmatprep.subr.mxu0 0.0
        %756 = vmatpush1.msra.mxu0 0.0
        %757 = vmatprep.subr.mxu0 0.0
        %758 = vmatpush1.msra.mxu0 0.0
        %759 = vmatprep.subr.mxu0 0.0
        %760 = vmatpush1.msra.mxu0 0.0
        %761 = vmatprep.subr.mxu0 0.0
        %762 = vmatpush1.msra.mxu0 0.0
        %763 = vmatprep.subr.mxu0 0.0
        %764 = vmatpush1.msra.mxu0 0.0
        %765 = vmatprep.subr.mxu0 0.0
        %766 = vmatpush1.msra.mxu0 0.0
        %767 = vmatprep.subr.mxu0 0.0
        %768 = vmatpush1.msra.mxu0 0.0
        %769 = vmatprep.subr.mxu0 0.0
        %770 = vmatpush1.msra.mxu0 0.0
        %771 = vmatprep.subr.mxu0 0.0
        %772 = vmatpush1.msra.mxu0 0.0
        %773 = vmatprep.subr.mxu0 0.0
        %774 = vmatpush1.msra.mxu0 0.0
        %775 = vmatprep.subr.mxu0 0.0
        %776 = vmatpush1.msra.mxu0 0.0
        %777 = vmatprep.subr.mxu0 0.0
        %778 = vmatpush1.msra.mxu0 0.0
        %779 = vmatprep.subr.mxu0 0.0
        %780 = vmatpush1.msra.mxu0 0.0
        %781 = vmatprep.subr.mxu0 0.0
        %782 = vmatpush1.msra.mxu0 0.0
        %783 = vmatprep.subr.mxu0 0.0
        %784 = vmatpush1.msra.mxu0 0.0
        %785 = vmatprep.subr.mxu0 0.0
        %786 = vmatpush1.msra.mxu0 0.0
        %787 = vmatprep.subr.mxu0 0.0
        %788 = vmatpush1.msra.mxu0 0.0
        %789 = vmatprep.subr.mxu0 0.0
        %790 = vmatpush1.msra.mxu0 0.0
        %791 = vmatprep.subr.mxu0 0.0
        %792 = vmatpush1.msra.mxu0 0.0
        %793 = vmatprep.subr.mxu0 0.0
        %794 = vmatpush1.msra.mxu0 0.0
        %795 = vmatprep.subr.mxu0 0.0
        %796 = vmatpush1.msra.mxu0 0.0
        %797 = vmatprep.subr.mxu0 0.0
        %798 = vmatpush1.msra.mxu0 0.0
        %799 = vmatprep.subr.mxu0 0.0
        %800 = vmatpush1.msra.mxu0 0.0
        %801 = vmatprep.subr.mxu0 0.0
        %802 = vmatpush1.msra.mxu0 0.0
        %803 = vmatprep.mubr.f32.mxu0 0.0
        %804 = vmatmul.mubr.f32.gmra.mrb[0].mxu0 %v597
        %v805 = vpop.f32.mrb[0].mxu0
        %v806 = vadd.f32 %v577, %v805
        %v807 = vpop.f32.mrb[0].mxu0
        %808 = vdwg.mxu0
        %809 = vmatprep.subr.mxu0 0.0
        %810 = vmatpush1.msra.mxu0 %v551
        %811 = vmatprep.subr.mxu0 0.0
        %812 = vmatpush1.msra.mxu0 0.0
        %813 = vmatprep.subr.mxu0 0.0
        %814 = vmatpush1.msra.mxu0 0.0
        %815 = vmatprep.subr.mxu0 0.0
        %816 = vmatpush1.msra.mxu0 0.0
        %817 = vmatprep.subr.mxu0 0.0
        %818 = vmatpush1.msra.mxu0 0.0
        %819 = vmatprep.subr.mxu0 0.0
        %820 = vmatpush1.msra.mxu0 0.0
        %821 = vmatprep.subr.mxu0 0.0
        %822 = vmatpush1.msra.mxu0 0.0
        %823 = vmatprep.subr.mxu0 0.0
        %824 = vmatpush1.msra.mxu0 0.0
        %825 = vmatprep.subr.mxu0 0.0
        %826 = vmatpush1.msra.mxu0 0.0
        %827 = vmatprep.subr.mxu0 0.0
        %828 = vmatpush1.msra.mxu0 0.0
        %829 = vmatprep.subr.mxu0 0.0
        %830 = vmatpush1.msra.mxu0 0.0
        %831 = vmatprep.subr.mxu0 0.0
        %832 = vmatpush1.msra.mxu0 0.0
        %833 = vmatprep.subr.mxu0 0.0
        %834 = vmatpush1.msra.mxu0 0.0
        %835 = vmatprep.subr.mxu0 0.0
        %836 = vmatpush1.msra.mxu0 0.0
        %837 = vmatprep.subr.mxu0 0.0
        %838 = vmatpush1.msra.mxu0 0.0
        %839 = vmatprep.subr.mxu0 0.0
        %840 = vmatpush1.msra.mxu0 0.0
        %841 = vmatprep.subr.mxu0 0.0
        %842 = vmatpush1.msra.mxu0 0.0
        %843 = vmatprep.subr.mxu0 0.0
        %844 = vmatpush1.msra.mxu0 0.0
        %845 = vmatprep.subr.mxu0 0.0
        %846 = vmatpush1.msra.mxu0 0.0
        %847 = vmatprep.subr.mxu0 0.0
        %848 = vmatpush1.msra.mxu0 0.0
        %849 = vmatprep.subr.mxu0 0.0
        %850 = vmatpush1.msra.mxu0 0.0
        %851 = vmatprep.subr.mxu0 0.0
        %852 = vmatpush1.msra.mxu0 0.0
        %853 = vmatprep.subr.mxu0 0.0
        %854 = vmatpush1.msra.mxu0 0.0
        %855 = vmatprep.subr.mxu0 0.0
        %856 = vmatpush1.msra.mxu0 0.0
        %857 = vmatprep.subr.mxu0 0.0
        %858 = vmatpush1.msra.mxu0 0.0
        %859 = vmatprep.subr.mxu0 0.0
        %860 = vmatpush1.msra.mxu0 0.0
        %861 = vmatprep.subr.mxu0 0.0
        %862 = vmatpush1.msra.mxu0 0.0
        %863 = vmatprep.subr.mxu0 0.0
        %864 = vmatpush1.msra.mxu0 0.0
        %865 = vmatprep.subr.mxu0 0.0
        %866 = vmatpush1.msra.mxu0 0.0
        %867 = vmatprep.subr.mxu0 0.0
        %868 = vmatpush1.msra.mxu0 0.0
        %869 = vmatprep.subr.mxu0 0.0
        %870 = vmatpush1.msra.mxu0 0.0
        %871 = vmatprep.subr.mxu0 0.0
        %872 = vmatpush1.msra.mxu0 0.0
        %873 = vmatprep.mubr.f32.mxu0 0.0
        %874 = vmatmul.mubr.f32.gmra.mrb[0].mxu0 %v597
        %v875 = vpop.f32.mrb[0].mxu0
        %v876 = vadd.f32 %v581, %v875
        %v877 = vpop.f32.mrb[0].mxu0
        %878 = vdwg.mxu0
        %879 = vmatprep.subr.mxu0 0.0
        %880 = vmatpush1.msra.mxu0 %v552
        %881 = vmatprep.subr.mxu0 0.0
        %882 = vmatpush1.msra.mxu0 0.0
        %883 = vmatprep.subr.mxu0 0.0
        %884 = vmatpush1.msra.mxu0 0.0
        %885 = vmatprep.subr.mxu0 0.0
        %886 = vmatpush1.msra.mxu0 0.0
        %887 = vmatprep.subr.mxu0 0.0
        %888 = vmatpush1.msra.mxu0 0.0
        %889 = vmatprep.subr.mxu0 0.0
        %890 = vmatpush1.msra.mxu0 0.0
        %891 = vmatprep.subr.mxu0 0.0
        %892 = vmatpush1.msra.mxu0 0.0
        %893 = vmatprep.subr.mxu0 0.0
        %894 = vmatpush1.msra.mxu0 0.0
        %895 = vmatprep.subr.mxu0 0.0
        %896 = vmatpush1.msra.mxu0 0.0
        %897 = vmatprep.subr.mxu0 0.0
        %898 = vmatpush1.msra.mxu0 0.0
        %899 = vmatprep.subr.mxu0 0.0
        %900 = vmatpush1.msra.mxu0 0.0
        %901 = vmatprep.subr.mxu0 0.0
        %902 = vmatpush1.msra.mxu0 0.0
        %903 = vmatprep.subr.mxu0 0.0
        %904 = vmatpush1.msra.mxu0 0.0
        %905 = vmatprep.subr.mxu0 0.0
        %906 = vmatpush1.msra.mxu0 0.0
        %907 = vmatprep.subr.mxu0 0.0
        %908 = vmatpush1.msra.mxu0 0.0
        %909 = vmatprep.subr.mxu0 0.0
        %910 = vmatpush1.msra.mxu0 0.0
        %911 = vmatprep.subr.mxu0 0.0
        %912 = vmatpush1.msra.mxu0 0.0
        %913 = vmatprep.subr.mxu0 0.0
        %914 = vmatpush1.msra.mxu0 0.0
        %915 = vmatprep.subr.mxu0 0.0
        %916 = vmatpush1.msra.mxu0 0.0
        %917 = vmatprep.subr.mxu0 0.0
        %918 = vmatpush1.msra.mxu0 0.0
        %919 = vmatprep.subr.mxu0 0.0
        %920 = vmatpush1.msra.mxu0 0.0
        %921 = vmatprep.subr.mxu0 0.0
        %922 = vmatpush1.msra.mxu0 0.0
        %923 = vmatprep.subr.mxu0 0.0
        %924 = vmatpush1.msra.mxu0 0.0
        %925 = vmatprep.subr.mxu0 0.0
        %926 = vmatpush1.msra.mxu0 0.0
        %927 = vmatprep.subr.mxu0 0.0
        %928 = vmatpush1.msra.mxu0 0.0
        %929 = vmatprep.subr.mxu0 0.0
        %930 = vmatpush1.msra.mxu0 0.0
        %931 = vmatprep.subr.mxu0 0.0
        %932 = vmatpush1.msra.mxu0 0.0
        %933 = vmatprep.subr.mxu0 0.0
        %934 = vmatpush1.msra.mxu0 0.0
        %935 = vmatprep.subr.mxu0 0.0
        %936 = vmatpush1.msra.mxu0 0.0
        %937 = vmatprep.subr.mxu0 0.0
        %938 = vmatpush1.msra.mxu0 0.0
        %939 = vmatprep.subr.mxu0 0.0
        %940 = vmatpush1.msra.mxu0 0.0
        %941 = vmatprep.subr.mxu0 0.0
        %942 = vmatpush1.msra.mxu0 0.0
        %943 = vmatprep.mubr.f32.mxu0 0.0
        %944 = vmatmul.mubr.f32.gmra.mrb[0].mxu0 %v597
        %v945 = vpop.f32.mrb[0].mxu0
        %v946 = vadd.f32 %v585, %v945
        %v947 = vpop.f32.mrb[0].mxu0
        %948 = vdwg.mxu0
        %949 = vmatprep.subr.mxu0 0.0
        %950 = vmatpush1.msra.mxu0 %v553
        %951 = vmatprep.subr.mxu0 0.0
        %952 = vmatpush1.msra.mxu0 0.0
        %953 = vmatprep.subr.mxu0 0.0
        %954 = vmatpush1.msra.mxu0 0.0
        %955 = vmatprep.subr.mxu0 0.0
        %956 = vmatpush1.msra.mxu0 0.0
        %957 = vmatprep.subr.mxu0 0.0
        %958 = vmatpush1.msra.mxu0 0.0
        %959 = vmatprep.subr.mxu0 0.0
        %960 = vmatpush1.msra.mxu0 0.0
        %961 = vmatprep.subr.mxu0 0.0
        %962 = vmatpush1.msra.mxu0 0.0
        %963 = vmatprep.subr.mxu0 0.0
        %964 = vmatpush1.msra.mxu0 0.0
        %965 = vmatprep.subr.mxu0 0.0
        %966 = vmatpush1.msra.mxu0 0.0
        %967 = vmatprep.subr.mxu0 0.0
        %968 = vmatpush1.msra.mxu0 0.0
        %969 = vmatprep.subr.mxu0 0.0
        %970 = vmatpush1.msra.mxu0 0.0
        %971 = vmatprep.subr.mxu0 0.0
        %972 = vmatpush1.msra.mxu0 0.0
        %973 = vmatprep.subr.mxu0 0.0
        %974 = vmatpush1.msra.mxu0 0.0
        %975 = vmatprep.subr.mxu0 0.0
        %976 = vmatpush1.msra.mxu0 0.0
        %977 = vmatprep.subr.mxu0 0.0
        %978 = vmatpush1.msra.mxu0 0.0
        %979 = vmatprep.subr.mxu0 0.0
        %980 = vmatpush1.msra.mxu0 0.0
        %981 = vmatprep.subr.mxu0 0.0
        %982 = vmatpush1.msra.mxu0 0.0
        %983 = vmatprep.subr.mxu0 0.0
        %984 = vmatpush1.msra.mxu0 0.0
        %985 = vmatprep.subr.mxu0 0.0
        %986 = vmatpush1.msra.mxu0 0.0
        %987 = vmatprep.subr.mxu0 0.0
        %988 = vmatpush1.msra.mxu0 0.0
        %989 = vmatprep.subr.mxu0 0.0
        %990 = vmatpush1.msra.mxu0 0.0
        %991 = vmatprep.subr.mxu0 0.0
        %992 = vmatpush1.msra.mxu0 0.0
        %993 = vmatprep.subr.mxu0 0.0
        %994 = vmatpush1.msra.mxu0 0.0
        %995 = vmatprep.subr.mxu0 0.0
        %996 = vmatpush1.msra.mxu0 0.0
        %997 = vmatprep.subr.mxu0 0.0
        %998 = vmatpush1.msra.mxu0 0.0
        %999 = vmatprep.subr.mxu0 0.0
        %1000 = vmatpush1.msra.mxu0 0.0
        %1001 = vmatprep.subr.mxu0 0.0
        %1002 = vmatpush1.msra.mxu0 0.0
        %1003 = vmatprep.subr.mxu0 0.0
        %1004 = vmatpush1.msra.mxu0 0.0
        %1005 = vmatprep.subr.mxu0 0.0
        %1006 = vmatpush1.msra.mxu0 0.0
        %1007 = vmatprep.subr.mxu0 0.0
        %1008 = vmatpush1.msra.mxu0 0.0
        %1009 = vmatprep.subr.mxu0 0.0
        %1010 = vmatpush1.msra.mxu0 0.0
        %1011 = vmatprep.subr.mxu0 0.0
        %1012 = vmatpush1.msra.mxu0 0.0
        %1013 = vmatprep.mubr.f32.mxu0 0.0
        %1014 = vmatmul.mubr.f32.gmra.mrb[0].mxu0 %v597
        %v1015 = vpop.f32.mrb[0].mxu0
        %v1016 = vadd.f32 %v589, %v1015
        %v1017 = vpop.f32.mrb[0].mxu0
        %1018 = vdwg.mxu0
        %vm1019 = vcmask 130048
        %v1021 = vsel %vm1019, %v666, 0
        %v1024 = vsel %vm1019, %v806, 0
        %1026 = vmatprep.subr.mxu0 0.0
        %1027 = vmatpush1.xpose.msra.mxu0 %v1024
        %1028 = vmatprep.subr.mxu0 0.0
        %1029 = vmatpush1.xpose.msra.mxu0 0.0
        %1030 = vmatprep.subr.mxu0 0.0
        %1031 = vmatpush1.xpose.msra.mxu0 0.0
        %1032 = vmatprep.subr.mxu0 0.0
        %1033 = vmatpush1.xpose.msra.mxu0 0.0
        %1034 = vmatprep.subr.mxu0 0.0
        %1035 = vmatpush1.xpose.msra.mxu0 0.0
        %1036 = vmatprep.subr.mxu0 0.0
        %1037 = vmatpush1.xpose.msra.mxu0 0.0
        %1038 = vmatprep.subr.mxu0 0.0
        %1039 = vmatpush1.xpose.msra.mxu0 0.0
        %1040 = vmatprep.subr.mxu0 0.0
        %1041 = vmatpush1.xpose.msra.mxu0 0.0
        %1042 = vmatprep.subr.mxu0 0.0
        %1043 = vmatpush1.xpose.msra.mxu0 0.0
        %1044 = vmatprep.subr.mxu0 0.0
        %1045 = vmatpush1.xpose.msra.mxu0 0.0
        %1046 = vmatprep.subr.mxu0 0.0
        %1047 = vmatpush1.xpose.msra.mxu0 0.0
        %1048 = vmatprep.subr.mxu0 0.0
        %1049 = vmatpush1.xpose.msra.mxu0 0.0
        %1050 = vmatprep.subr.mxu0 0.0
        %1051 = vmatpush1.xpose.msra.mxu0 0.0
        %1052 = vmatprep.subr.mxu0 0.0
        %1053 = vmatpush1.xpose.msra.mxu0 0.0
        %1054 = vmatprep.subr.mxu0 0.0
        %1055 = vmatpush1.xpose.msra.mxu0 0.0
        %1056 = vmatprep.subr.mxu0 0.0
        %1057 = vmatpush1.xpose.msra.mxu0 0.0
        %1058 = vmatprep.subr.mxu0 0.0
        %1059 = vmatpush1.xpose.msra.mxu0 0.0
        %1060 = vmatprep.subr.mxu0 0.0
        %1061 = vmatpush1.xpose.msra.mxu0 0.0
        %1062 = vmatprep.subr.mxu0 0.0
        %1063 = vmatpush1.xpose.msra.mxu0 0.0
        %1064 = vmatprep.subr.mxu0 0.0
        %1065 = vmatpush1.xpose.msra.mxu0 0.0
        %1066 = vmatprep.subr.mxu0 0.0
        %1067 = vmatpush1.xpose.msra.mxu0 0.0
        %1068 = vmatprep.subr.mxu0 0.0
        %1069 = vmatpush1.xpose.msra.mxu0 0.0
        %1070 = vmatprep.subr.mxu0 0.0
        %1071 = vmatpush1.xpose.msra.mxu0 0.0
        %1072 = vmatprep.subr.mxu0 0.0
        %1073 = vmatpush1.xpose.msra.mxu0 0.0
        %1074 = vmatprep.subr.mxu0 0.0
        %1075 = vmatpush1.xpose.msra.mxu0 0.0
        %1076 = vmatprep.subr.mxu0 0.0
        %1077 = vmatpush1.xpose.msra.mxu0 0.0
        %1078 = vmatprep.subr.mxu0 0.0
        %1079 = vmatpush1.xpose.msra.mxu0 0.0
        %1080 = vmatprep.subr.mxu0 0.0
        %1081 = vmatpush1.xpose.msra.mxu0 0.0
        %1082 = vmatprep.subr.mxu0 0.0
        %1083 = vmatpush1.xpose.msra.mxu0 0.0
        %1084 = vmatprep.subr.mxu0 0.0
        %1085 = vmatpush1.xpose.msra.mxu0 0.0
        %1086 = vmatprep.subr.mxu0 0.0
        %1087 = vmatpush1.xpose.msra.mxu0 0.0
        %1088 = vmatprep.subr.mxu0 0.0
        %1089 = vmatpush1.xpose.msra.mxu0 0.0
        %1090 = vmatprep.mubr.f32.mxu0 0.0
        %1091 = vmatmul.mubr.f32.gmra.mrb[0].mxu0 %v1021
        %v1092 = vpop.f32.mrb[0].mxu0
        %v1093 = vadd.f32 0.0, %v1092
        %v1094 = vpop.f32.mrb[0].mxu0
        %1095 = vdwg.mxu0
        %v1097 = vsel %vm1019, %v736, 0
        %v1100 = vsel %vm1019, %v876, 0
        %1102 = vmatprep.subr.mxu0 0.0
        %1103 = vmatpush1.xpose.msra.mxu0 %v1100
        %1104 = vmatprep.subr.mxu0 0.0
        %1105 = vmatpush1.xpose.msra.mxu0 0.0
        %1106 = vmatprep.subr.mxu0 0.0
        %1107 = vmatpush1.xpose.msra.mxu0 0.0
        %1108 = vmatprep.subr.mxu0 0.0
        %1109 = vmatpush1.xpose.msra.mxu0 0.0
        %1110 = vmatprep.subr.mxu0 0.0
        %1111 = vmatpush1.xpose.msra.mxu0 0.0
        %1112 = vmatprep.subr.mxu0 0.0
        %1113 = vmatpush1.xpose.msra.mxu0 0.0
        %1114 = vmatprep.subr.mxu0 0.0
        %1115 = vmatpush1.xpose.msra.mxu0 0.0
        %1116 = vmatprep.subr.mxu0 0.0
        %1117 = vmatpush1.xpose.msra.mxu0 0.0
        %1118 = vmatprep.subr.mxu0 0.0
        %1119 = vmatpush1.xpose.msra.mxu0 0.0
        %1120 = vmatprep.subr.mxu0 0.0
        %1121 = vmatpush1.xpose.msra.mxu0 0.0
        %1122 = vmatprep.subr.mxu0 0.0
        %1123 = vmatpush1.xpose.msra.mxu0 0.0
        %1124 = vmatprep.subr.mxu0 0.0
        %1125 = vmatpush1.xpose.msra.mxu0 0.0
        %1126 = vmatprep.subr.mxu0 0.0
        %1127 = vmatpush1.xpose.msra.mxu0 0.0
        %1128 = vmatprep.subr.mxu0 0.0
        %1129 = vmatpush1.xpose.msra.mxu0 0.0
        %1130 = vmatprep.subr.mxu0 0.0
        %1131 = vmatpush1.xpose.msra.mxu0 0.0
        %1132 = vmatprep.subr.mxu0 0.0
        %1133 = vmatpush1.xpose.msra.mxu0 0.0
        %1134 = vmatprep.subr.mxu0 0.0
        %1135 = vmatpush1.xpose.msra.mxu0 0.0
        %1136 = vmatprep.subr.mxu0 0.0
        %1137 = vmatpush1.xpose.msra.mxu0 0.0
        %1138 = vmatprep.subr.mxu0 0.0
        %1139 = vmatpush1.xpose.msra.mxu0 0.0
        %1140 = vmatprep.subr.mxu0 0.0
        %1141 = vmatpush1.xpose.msra.mxu0 0.0
        %1142 = vmatprep.subr.mxu0 0.0
        %1143 = vmatpush1.xpose.msra.mxu0 0.0
        %1144 = vmatprep.subr.mxu0 0.0
        %1145 = vmatpush1.xpose.msra.mxu0 0.0
        %1146 = vmatprep.subr.mxu0 0.0
        %1147 = vmatpush1.xpose.msra.mxu0 0.0
        %1148 = vmatprep.subr.mxu0 0.0
        %1149 = vmatpush1.xpose.msra.mxu0 0.0
        %1150 = vmatprep.subr.mxu0 0.0
        %1151 = vmatpush1.xpose.msra.mxu0 0.0
        %1152 = vmatprep.subr.mxu0 0.0
        %1153 = vmatpush1.xpose.msra.mxu0 0.0
        %1154 = vmatprep.subr.mxu0 0.0
        %1155 = vmatpush1.xpose.msra.mxu0 0.0
        %1156 = vmatprep.subr.mxu0 0.0
        %1157 = vmatpush1.xpose.msra.mxu0 0.0
        %1158 = vmatprep.subr.mxu0 0.0
        %1159 = vmatpush1.xpose.msra.mxu0 0.0
        %1160 = vmatprep.subr.mxu0 0.0
        %1161 = vmatpush1.xpose.msra.mxu0 0.0
        %1162 = vmatprep.subr.mxu0 0.0
        %1163 = vmatpush1.xpose.msra.mxu0 0.0
        %1164 = vmatprep.subr.mxu0 0.0
        %1165 = vmatpush1.xpose.msra.mxu0 0.0
        %1166 = vmatprep.mubr.f32.mxu0 0.0
        %1167 = vmatmul.mubr.f32.gmra.mrb[0].mxu0 %v1097
        %v1168 = vpop.f32.mrb[0].mxu0
        %v1169 = vadd.f32 0.0, %v1168
        %v1170 = vpop.f32.mrb[0].mxu0
        %1171 = vdwg.mxu0
        %v1172 = vmul.f32 %v1093, 0.25
        %v1173 = vmul.f32 %v1169, 0.25
        %v1174 = vsel %vm536, %v1172, -inf
        %1175 = vmax.xlane.f32.xlu0 %v1174
        %v1176 = vpop.xlane.xlu0 %1175
        %v1177 = vsel %vm536, %v1173, -inf
        %1178 = vmax.xlane.f32.xlu0 %v1177
        %v1179 = vpop.xlane.xlu0 %1178
        %v1180 = vsub.f32 %v1172, %v1176
        %v1181 = vsub.f32 %v1173, %v1179
        %v1182 = vmul.f32 %v1180, 1.442695
        %v1183 = vpow.pop %v1182
        %v1184 = vmul.f32 %v1181, 1.442695
        %v1185 = vpow.pop %v1184
        %v1186 = vsel %vm536, %v1183, 0.0
        %1187 = vadd.xlane.f32.xlu0 %v1186
        %v1188 = vpop.xlane.xlu0 %1187
        %v1189 = vsel %vm536, %v1185, 0.0
        %1190 = vadd.xlane.f32.xlu0 %v1189
        %v1191 = vpop.xlane.xlu0 %1190
        %v1192 = vrcp.pop %v1188
        %v1193 = vmul.f32 %v1183, %v1192
        %v1194 = vrcp.pop %v1191
        %v1195 = vmul.f32 %v1185, %v1194
        %v1196 = vmul.f32 %v1193, 0.5
        %v1197 = vmul.f32 %v1195, 0.5
        %v1198 = vmul.f32 %v547, 0.5
        %v1199 = vadd.f32 %v1196, %v1198
        %v1200 = vadd.f32 %v1197, %v1198
        %v1201 = vsel %vm536, %v1199, -inf
        %1202 = vmax.xlane.f32.xlu0 %v1201
        %v1203 = vpop.xlane.xlu0 %1202
        %v1204 = vsel %vm536, %v1200, -inf
        %1205 = vmax.xlane.f32.xlu0 %v1204
        %v1206 = vpop.xlane.xlu0 %1205
        %v1207 = vsub.f32 %v1199, %v1203
        %v1208 = vsub.f32 %v1200, %v1206
        %v1209 = vmul.f32 %v1207, 1.442695
        %v1210 = vpow.pop %v1209
        %v1211 = vmul.f32 %v1208, 1.442695
        %v1212 = vpow.pop %v1211
        %v1213 = vsel %vm536, %v1210, 0.0
        %1214 = vadd.xlane.f32.xlu0 %v1213
        %v1215 = vpop.xlane.xlu0 %1214
        %v1216 = vsel %vm536, %v1212, 0.0
        %1217 = vadd.xlane.f32.xlu0 %v1216
        %v1218 = vpop.xlane.xlu0 %1217
        %v1219 = vrcp.pop %v1215
        %v1220 = vmul.f32 %v1210, %v1219
        %v1221 = vrcp.pop %v1218
        %v1222 = vmul.f32 %v1212, %v1221
        %v1224 = vsel %vm536, %v1220, 0
        %1226 = vmatprep.subr.mxu0 0.0
        %1227 = vmatpush1.msra.mxu0 %v946
        %1228 = vmatprep.subr.mxu0 0.0
        %1229 = vmatpush1.msra.mxu0 0.0
        %1230 = vmatprep.subr.mxu0 0.0
        %1231 = vmatpush1.msra.mxu0 0.0
        %1232 = vmatprep.subr.mxu0 0.0
        %1233 = vmatpush1.msra.mxu0 0.0
        %1234 = vmatprep.subr.mxu0 0.0
        %1235 = vmatpush1.msra.mxu0 0.0
        %1236 = vmatprep.subr.mxu0 0.0
        %1237 = vmatpush1.msra.mxu0 0.0
        %1238 = vmatprep.subr.mxu0 0.0
        %1239 = vmatpush1.msra.mxu0 0.0
        %1240 = vmatprep.subr.mxu0 0.0
        %1241 = vmatpush1.msra.mxu0 0.0
        %1242 = vmatprep.subr.mxu0 0.0
        %1243 = vmatpush1.msra.mxu0 0.0
        %1244 = vmatprep.subr.mxu0 0.0
        %1245 = vmatpush1.msra.mxu0 0.0
        %1246 = vmatprep.subr.mxu0 0.0
        %1247 = vmatpush1.msra.mxu0 0.0
        %1248 = vmatprep.subr.mxu0 0.0
        %1249 = vmatpush1.msra.mxu0 0.0
        %1250 = vmatprep.subr.mxu0 0.0
        %1251 = vmatpush1.msra.mxu0 0.0
        %1252 = vmatprep.subr.mxu0 0.0
        %1253 = vmatpush1.msra.mxu0 0.0
        %1254 = vmatprep.subr.mxu0 0.0
        %1255 = vmatpush1.msra.mxu0 0.0
        %1256 = vmatprep.subr.mxu0 0.0
        %1257 = vmatpush1.msra.mxu0 0.0
        %1258 = vmatprep.subr.mxu0 0.0
        %1259 = vmatpush1.msra.mxu0 0.0
        %1260 = vmatprep.subr.mxu0 0.0
        %1261 = vmatpush1.msra.mxu0 0.0
        %1262 = vmatprep.subr.mxu0 0.0
        %1263 = vmatpush1.msra.mxu0 0.0
        %1264 = vmatprep.subr.mxu0 0.0
        %1265 = vmatpush1.msra.mxu0 0.0
        %1266 = vmatprep.subr.mxu0 0.0
        %1267 = vmatpush1.msra.mxu0 0.0
        %1268 = vmatprep.subr.mxu0 0.0
        %1269 = vmatpush1.msra.mxu0 0.0
        %1270 = vmatprep.subr.mxu0 0.0
        %1271 = vmatpush1.msra.mxu0 0.0
        %1272 = vmatprep.subr.mxu0 0.0
        %1273 = vmatpush1.msra.mxu0 0.0
        %1274 = vmatprep.subr.mxu0 0.0
        %1275 = vmatpush1.msra.mxu0 0.0
        %1276 = vmatprep.subr.mxu0 0.0
        %1277 = vmatpush1.msra.mxu0 0.0
        %1278 = vmatprep.subr.mxu0 0.0
        %1279 = vmatpush1.msra.mxu0 0.0
        %1280 = vmatprep.subr.mxu0 0.0
        %1281 = vmatpush1.msra.mxu0 0.0
        %1282 = vmatprep.subr.mxu0 0.0
        %1283 = vmatpush1.msra.mxu0 0.0
        %1284 = vmatprep.subr.mxu0 0.0
        %1285 = vmatpush1.msra.mxu0 0.0
        %1286 = vmatprep.subr.mxu0 0.0
        %1287 = vmatpush1.msra.mxu0 0.0
        %1288 = vmatprep.subr.mxu0 0.0
        %1289 = vmatpush1.msra.mxu0 0.0
        %1290 = vmatprep.mubr.f32.mxu0 0.0
        %1291 = vmatmul.mubr.f32.gmra.mrb[0].mxu0 %v1224
        %v1292 = vpop.f32.mrb[0].mxu0
        %v1293 = vadd.f32 0.0, %v1292
        %v1294 = vpop.f32.mrb[0].mxu0
        %1295 = vdwg.mxu0
        %v1297 = vsel %vm536, %v1222, 0
        %1299 = vmatprep.subr.mxu0 0.0
        %1300 = vmatpush1.msra.mxu0 %v1016
        %1301 = vmatprep.subr.mxu0 0.0
        %1302 = vmatpush1.msra.mxu0 0.0
        %1303 = vmatprep.subr.mxu0 0.0
        %1304 = vmatpush1.msra.mxu0 0.0
        %1305 = vmatprep.subr.mxu0 0.0
        %1306 = vmatpush1.msra.mxu0 0.0
        %1307 = vmatprep.subr.mxu0 0.0
        %1308 = vmatpush1.msra.mxu0 0.0
        %1309 = vmatprep.subr.mxu0 0.0
        %1310 = vmatpush1.msra.mxu0 0.0
        %1311 = vmatprep.subr.mxu0 0.0
        %1312 = vmatpush1.msra.mxu0 0.0
        %1313 = vmatprep.subr.mxu0 0.0
        %1314 = vmatpush1.msra.mxu0 0.0
        %1315 = vmatprep.subr.mxu0 0.0
        %1316 = vmatpush1.msra.mxu0 0.0
        %1317 = vmatprep.subr.mxu0 0.0
        %1318 = vmatpush1.msra.mxu0 0.0
        %1319 = vmatprep.subr.mxu0 0.0
        %1320 = vmatpush1.msra.mxu0 0.0
        %1321 = vmatprep.subr.mxu0 0.0
        %1322 = vmatpush1.msra.mxu0 0.0
        %1323 = vmatprep.subr.mxu0 0.0
        %1324 = vmatpush1.msra.mxu0 0.0
        %1325 = vmatprep.subr.mxu0 0.0
        %1326 = vmatpush1.msra.mxu0 0.0
        %1327 = vmatprep.subr.mxu0 0.0
        %1328 = vmatpush1.msra.mxu0 0.0
        %1329 = vmatprep.subr.mxu0 0.0
        %1330 = vmatpush1.msra.mxu0 0.0
        %1331 = vmatprep.subr.mxu0 0.0
        %1332 = vmatpush1.msra.mxu0 0.0
        %1333 = vmatprep.subr.mxu0 0.0
        %1334 = vmatpush1.msra.mxu0 0.0
        %1335 = vmatprep.subr.mxu0 0.0
        %1336 = vmatpush1.msra.mxu0 0.0
        %1337 = vmatprep.subr.mxu0 0.0
        %1338 = vmatpush1.msra.mxu0 0.0
        %1339 = vmatprep.subr.mxu0 0.0
        %1340 = vmatpush1.msra.mxu0 0.0
        %1341 = vmatprep.subr.mxu0 0.0
        %1342 = vmatpush1.msra.mxu0 0.0
        %1343 = vmatprep.subr.mxu0 0.0
        %1344 = vmatpush1.msra.mxu0 0.0
        %1345 = vmatprep.subr.mxu0 0.0
        %1346 = vmatpush1.msra.mxu0 0.0
        %1347 = vmatprep.subr.mxu0 0.0
        %1348 = vmatpush1.msra.mxu0 0.0
        %1349 = vmatprep.subr.mxu0 0.0
        %1350 = vmatpush1.msra.mxu0 0.0
        %1351 = vmatprep.subr.mxu0 0.0
        %1352 = vmatpush1.msra.mxu0 0.0
        %1353 = vmatprep.subr.mxu0 0.0
        %1354 = vmatpush1.msra.mxu0 0.0
        %1355 = vmatprep.subr.mxu0 0.0
        %1356 = vmatpush1.msra.mxu0 0.0
        %1357 = vmatprep.subr.mxu0 0.0
        %1358 = vmatpush1.msra.mxu0 0.0
        %1359 = vmatprep.subr.mxu0 0.0
        %1360 = vmatpush1.msra.mxu0 0.0
        %1361 = vmatprep.subr.mxu0 0.0
        %1362 = vmatpush1.msra.mxu0 0.0
        %1363 = vmatprep.mubr.f32.mxu0 0.0
        %1364 = vmatmul.mubr.f32.gmra.mrb[0].mxu0 %v1297
        %v1365 = vpop.f32.mrb[0].mxu0
        %v1366 = vadd.f32 0.0, %v1365
        %v1367 = vpop.f32.mrb[0].mxu0
        %1368 = vdwg.mxu0
        %v1369 = vld [vmem:[%s4] sm:$0xff]
        %v1370 = vld [vmem:[%s4 + $0x8] sm:$0xff]
        %v1371 = vld [vmem:[%s4 + $0x10] sm:$0xff]
        %v1372 = vld [vmem:[%s4 + $0x18] sm:$0xff]
        %v1374 = vsel %vm1019, %v1293, 0
        %1376 = vmatprep.subr.mxu0 0.0
        %1377 = vmatpush1.msra.mxu0 %v1369
        %1378 = vmatprep.subr.mxu0 0.0
        %1379 = vmatpush1.msra.mxu0 %v1370
        %1380 = vmatprep.subr.mxu0 0.0
        %1381 = vmatpush1.msra.mxu0 0.0
        %1382 = vmatprep.subr.mxu0 0.0
        %1383 = vmatpush1.msra.mxu0 0.0
        %1384 = vmatprep.subr.mxu0 0.0
        %1385 = vmatpush1.msra.mxu0 0.0
        %1386 = vmatprep.subr.mxu0 0.0
        %1387 = vmatpush1.msra.mxu0 0.0
        %1388 = vmatprep.subr.mxu0 0.0
        %1389 = vmatpush1.msra.mxu0 0.0
        %1390 = vmatprep.subr.mxu0 0.0
        %1391 = vmatpush1.msra.mxu0 0.0
        %1392 = vmatprep.subr.mxu0 0.0
        %1393 = vmatpush1.msra.mxu0 0.0
        %1394 = vmatprep.subr.mxu0 0.0
        %1395 = vmatpush1.msra.mxu0 0.0
        %1396 = vmatprep.subr.mxu0 0.0
        %1397 = vmatpush1.msra.mxu0 0.0
        %1398 = vmatprep.subr.mxu0 0.0
        %1399 = vmatpush1.msra.mxu0 0.0
        %1400 = vmatprep.subr.mxu0 0.0
        %1401 = vmatpush1.msra.mxu0 0.0
        %1402 = vmatprep.subr.mxu0 0.0
        %1403 = vmatpush1.msra.mxu0 0.0
        %1404 = vmatprep.subr.mxu0 0.0
        %1405 = vmatpush1.msra.mxu0 0.0
        %1406 = vmatprep.subr.mxu0 0.0
        %1407 = vmatpush1.msra.mxu0 0.0
        %1408 = vmatprep.subr.mxu0 0.0
        %1409 = vmatpush1.msra.mxu0 0.0
        %1410 = vmatprep.subr.mxu0 0.0
        %1411 = vmatpush1.msra.mxu0 0.0
        %1412 = vmatprep.subr.mxu0 0.0
        %1413 = vmatpush1.msra.mxu0 0.0
        %1414 = vmatprep.subr.mxu0 0.0
        %1415 = vmatpush1.msra.mxu0 0.0
        %1416 = vmatprep.subr.mxu0 0.0
        %1417 = vmatpush1.msra.mxu0 0.0
        %1418 = vmatprep.subr.mxu0 0.0
        %1419 = vmatpush1.msra.mxu0 0.0
        %1420 = vmatprep.subr.mxu0 0.0
        %1421 = vmatpush1.msra.mxu0 0.0
        %1422 = vmatprep.subr.mxu0 0.0
        %1423 = vmatpush1.msra.mxu0 0.0
        %1424 = vmatprep.subr.mxu0 0.0
        %1425 = vmatpush1.msra.mxu0 0.0
        %1426 = vmatprep.subr.mxu0 0.0
        %1427 = vmatpush1.msra.mxu0 0.0
        %1428 = vmatprep.subr.mxu0 0.0
        %1429 = vmatpush1.msra.mxu0 0.0
        %1430 = vmatprep.subr.mxu0 0.0
        %1431 = vmatpush1.msra.mxu0 0.0
        %1432 = vmatprep.subr.mxu0 0.0
        %1433 = vmatpush1.msra.mxu0 0.0
        %1434 = vmatprep.subr.mxu0 0.0
        %1435 = vmatpush1.msra.mxu0 0.0
        %1436 = vmatprep.subr.mxu0 0.0
        %1437 = vmatpush1.msra.mxu0 0.0
        %1438 = vmatprep.subr.mxu0 0.0
        %1439 = vmatpush1.msra.mxu0 0.0
        %1440 = vmatprep.mubr.f32.mxu0 0.0
        %1441 = vmatmul.mubr.f32.gmra.mrb[0].mxu0 %v1374
        %v1442 = vpop.f32.mrb[0].mxu0
        %v1443 = vadd.f32 0.0, %v1442
        %v1444 = vpop.f32.mrb[0].mxu0
        %1445 = vdwg.mxu0
        %v1447 = vsel %vm1019, %v1366, 0
        %1449 = vmatprep.subr.mxu0 0.0
        %1450 = vmatpush1.msra.mxu0 %v1371
        %1451 = vmatprep.subr.mxu0 0.0
        %1452 = vmatpush1.msra.mxu0 %v1372
        %1453 = vmatprep.subr.mxu0 0.0
        %1454 = vmatpush1.msra.mxu0 0.0
        %1455 = vmatprep.subr.mxu0 0.0
        %1456 = vmatpush1.msra.mxu0 0.0
        %1457 = vmatprep.subr.mxu0 0.0
        %1458 = vmatpush1.msra.mxu0 0.0
        %1459 = vmatprep.subr.mxu0 0.0
        %1460 = vmatpush1.msra.mxu0 0.0
        %1461 = vmatprep.subr.mxu0 0.0
        %1462 = vmatpush1.msra.mxu0 0.0
        %1463 = vmatprep.subr.mxu0 0.0
        %1464 = vmatpush1.msra.mxu0 0.0
        %1465 = vmatprep.subr.mxu0 0.0
        %1466 = vmatpush1.msra.mxu0 0.0
        %1467 = vmatprep.subr.mxu0 0.0
        %1468 = vmatpush1.msra.mxu0 0.0
        %1469 = vmatprep.subr.mxu0 0.0
        %1470 = vmatpush1.msra.mxu0 0.0
        %1471 = vmatprep.subr.mxu0 0.0
        %1472 = vmatpush1.msra.mxu0 0.0
        %1473 = vmatprep.subr.mxu0 0.0
        %1474 = vmatpush1.msra.mxu0 0.0
        %1475 = vmatprep.subr.mxu0 0.0
        %1476 = vmatpush1.msra.mxu0 0.0
        %1477 = vmatprep.subr.mxu0 0.0
        %1478 = vmatpush1.msra.mxu0 0.0
        %1479 = vmatprep.subr.mxu0 0.0
        %1480 = vmatpush1.msra.mxu0 0.0
        %1481 = vmatprep.subr.mxu0 0.0
        %1482 = vmatpush1.msra.mxu0 0.0
        %1483 = vmatprep.subr.mxu0 0.0
        %1484 = vmatpush1.msra.mxu0 0.0
        %1485 = vmatprep.subr.mxu0 0.0
        %1486 = vmatpush1.msra.mxu0 0.0
        %1487 = vmatprep.subr.mxu0 0.0
        %1488 = vmatpush1.msra.mxu0 0.0
        %1489 = vmatprep.subr.mxu0 0.0
        %1490 = vmatpush1.msra.mxu0 0.0
        %1491 = vmatprep.subr.mxu0 0.0
        %1492 = vmatpush1.msra.mxu0 0.0
        %1493 = vmatprep.subr.mxu0 0.0
        %1494 = vmatpush1.msra.mxu0 0.0
        %1495 = vmatprep.subr.mxu0 0.0
        %1496 = vmatpush1.msra.mxu0 0.0
        %1497 = vmatprep.subr.mxu0 0.0
        %1498 = vmatpush1.msra.mxu0 0.0
        %1499 = vmatprep.subr.mxu0 0.0
        %1500 = vmatpush1.msra.mxu0 0.0
        %1501 = vmatprep.subr.mxu0 0.0
        %1502 = vmatpush1.msra.mxu0 0.0
        %1503 = vmatprep.subr.mxu0 0.0
        %1504 = vmatpush1.msra.mxu0 0.0
        %1505 = vmatprep.subr.mxu0 0.0
        %1506 = vmatpush1.msra.mxu0 0.0
        %1507 = vmatprep.subr.mxu0 0.0
        %1508 = vmatpush1.msra.mxu0 0.0
        %1509 = vmatprep.subr.mxu0 0.0
        %1510 = vmatpush1.msra.mxu0 0.0
        %1511 = vmatprep.subr.mxu0 0.0
        %1512 = vmatpush1.msra.mxu0 0.0
        %1513 = vmatprep.mubr.f32.mxu0 0.0
        %1514 = vmatmul.mubr.f32.gmra.mrb[0].mxu0 %v1447
        %v1515 = vpop.f32.mrb[0].mxu0
        %v1516 = vadd.f32 0.0, %v1515
        %v1517 = vpop.f32.mrb[0].mxu0
        %1518 = vdwg.mxu0
        %v1519 = vsel %vm536, %v1443, 0.0
        %v1520 = vsel %vm536, %v1516, 0.0
        %v1521 = vadd.f32 %v1519, %v1520
        %v1522 = vld [vmem:[%s5] sm:$0x1]
        %v1524 = vlaneseq
        %v1525 = vshrl.u32 %v1524, 7
        %v1526 = vsub.s32 0, %v1525
        %v1527 = vrot.slane %v1522, %v1526
        %v1529 = vadd.f32 %v1521, %v1527
        %v1530 = vld [vmem:[%s6] sm:$0x1]
        %v1531 = vld [vmem:[#allocation5] sm:$0x1]
        %v1532 = vsel %vm536, %v1529, 0.0
        %1533 = vadd.xlane.f32.xlu0 %v1532
        %v1534 = vpop.xlane.xlu0 %1533
        %v1535 = vrcp.pop 8.0
        %v1536 = vmul.f32 %v1534, %v1535
        %v1537 = vsub.f32 %v1529, %v1536
        %v1538 = vmul.f32 %v1537, %v1537
        %v1539 = vsel %vm536, %v1538, 0.0
        %1540 = vadd.xlane.f32.xlu0 %v1539
        %v1541 = vpop.xlane.xlu0 %1540
        %v1542 = vmul.f32 %v1541, %v1535
        %v1543 = vadd.f32 %v1542, 1e-05
        %v1544 = vrsqrt.pop %v1543
        %v1545 = vmul.f32 %v1537, %v1544
        %v1547 = vlaneseq
        %v1548 = vshrl.u32 %v1547, 7
        %v1549 = vsub.s32 0, %v1548
        %v1550 = vrot.slane %v1530, %v1549
        %v1552 = vmul.f32 %v1545, %v1550
        %v1554 = vlaneseq
        %v1555 = vshrl.u32 %v1554, 7
        %v1556 = vsub.s32 0, %v1555
        %v1557 = vrot.slane %v1531, %v1556
        %v1559 = vadd.f32 %v1552, %v1557
        %v1560 = vadd.f32 %v1559, %v533
        %v1561 = vld [vmem:[%s10] sm:$0xff]
        %v1562 = vld [vmem:[#allocation7] sm:$0x1]
        %v1564 = vlaneseq
        %v1565 = vshrl.u32 %v1564, 7
        %v1566 = vsub.s32 0, %v1565
        %v1567 = vrot.slane %v1562, %v1566
        %v1570 = vsel %vm536, %v1560, 0
        %1572 = vmatprep.subr.mxu0 0.0
        %1573 = vmatpush1.msra.mxu0 %v1561
        %1574 = vmatprep.subr.mxu0 0.0
        %1575 = vmatpush1.msra.mxu0 0.0
        %1576 = vmatprep.subr.mxu0 0.0
        %1577 = vmatpush1.msra.mxu0 0.0
        %1578 = vmatprep.subr.mxu0 0.0
        %1579 = vmatpush1.msra.mxu0 0.0
        %1580 = vmatprep.subr.mxu0 0.0
        %1581 = vmatpush1.msra.mxu0 0.0
        %1582 = vmatprep.subr.mxu0 0.0
        %1583 = vmatpush1.msra.mxu0 0.0
        %1584 = vmatprep.subr.mxu0 0.0
        %1585 = vmatpush1.msra.mxu0 0.0
        %1586 = vmatprep.subr.mxu0 0.0
        %1587 = vmatpush1.msra.mxu0 0.0
        %1588 = vmatprep.subr.mxu0 0.0
        %1589 = vmatpush1.msra.mxu0 0.0
        %1590 = vmatprep.subr.mxu0 0.0
        %1591 = vmatpush1.msra.mxu0 0.0
        %1592 = vmatprep.subr.mxu0 0.0
        %1593 = vmatpush1.msra.mxu0 0.0
        %1594 = vmatprep.subr.mxu0 0.0
        %1595 = vmatpush1.msra.mxu0 0.0
        %1596 = vmatprep.subr.mxu0 0.0
        %1597 = vmatpush1.msra.mxu0 0.0
        %1598 = vmatprep.subr.mxu0 0.0
        %1599 = vmatpush1.msra.mxu0 0.0
        %1600 = vmatprep.subr.mxu0 0.0
        %1601 = vmatpush1.msra.mxu0 0.0
        %1602 = vmatprep.subr.mxu0 0.0
        %1603 = vmatpush1.msra.mxu0 0.0
        %1604 = vmatprep.subr.mxu0 0.0
        %1605 = vmatpush1.msra.mxu0 0.0
        %1606 = vmatprep.subr.mxu0 0.0
        %1607 = vmatpush1.msra.mxu0 0.0
        %1608 = vmatprep.subr.mxu0 0.0
        %1609 = vmatpush1.msra.mxu0 0.0
        %1610 = vmatprep.subr.mxu0 0.0
        %1611 = vmatpush1.msra.mxu0 0.0
        %1612 = vmatprep.subr.mxu0 0.0
        %1613 = vmatpush1.msra.mxu0 0.0
        %1614 = vmatprep.subr.mxu0 0.0
        %1615 = vmatpush1.msra.mxu0 0.0
        %1616 = vmatprep.subr.mxu0 0.0
        %1617 = vmatpush1.msra.mxu0 0.0
        %1618 = vmatprep.subr.mxu0 0.0
        %1619 = vmatpush1.msra.mxu0 0.0
        %1620 = vmatprep.subr.mxu0 0.0
        %1621 = vmatpush1.msra.mxu0 0.0
        %1622 = vmatprep.subr.mxu0 0.0
        %1623 = vmatpush1.msra.mxu0 0.0
        %1624 = vmatprep.subr.mxu0 0.0
        %1625 = vmatpush1.msra.mxu0 0.0
        %1626 = vmatprep.subr.mxu0 0.0
        %1627 = vmatpush1.msra.mxu0 0.0
        %1628 = vmatprep.subr.mxu0 0.0
        %1629 = vmatpush1.msra.mxu0 0.0
        %1630 = vmatprep.subr.mxu0 0.0
        %1631 = vmatpush1.msra.mxu0 0.0
        %1632 = vmatprep.subr.mxu0 0.0
        %1633 = vmatpush1.msra.mxu0 0.0
        %1634 = vmatprep.subr.mxu0 0.0
        %1635 = vmatpush1.msra.mxu0 0.0
        %1636 = vmatprep.mubr.f32.mxu0 0.0
        %1637 = vmatmul.mubr.f32.gmra.mrb[0].mxu0 %v1570
        %v1638 = vpop.f32.mrb[0].mxu0
        %v1639 = vadd.f32 %v1567, %v1638
        %v1640 = vpop.f32.mrb[0].mxu0
        %1641 = vdwg.mxu0
        %v1642 = vmul.f32 %v1639, 0.5
        %v1643 = vmul.f32 %v1639, 0.044715
        %v1644 = vmul.f32 %v1643, %v1639
        %v1645 = vmul.f32 %v1644, %v1639
        %v1646 = vadd.f32 %v1639, %v1645
        %v1647 = vmul.f32 %v1646, 0.7978846
        %v1648 = vtanh.pop %v1647
        %v1649 = vadd.f32 %v1648, 1.0
        %v1650 = vmul.f32 %v1642, %v1649
        %v1651 = vld [vmem:[%s12] sm:$0xff]
        %v1652 = vld [vmem:[%s12 + $0x8] sm:$0xff]
        %v1653 = vld [vmem:[%s12 + $0x10] sm:$0xff]
        %v1654 = vld [vmem:[%s12 + $0x18] sm:$0xff]
        %v1655 = vld [vmem:[#allocation8] sm:$0x1]
        %v1657 = vlaneseq
        %v1658 = vshrl.u32 %v1657, 7
        %v1659 = vsub.s32 0, %v1658
        %v1660 = vrot.slane %v1655, %v1659
        %vm1662 = vcmask 261120
        %v1664 = vsel %vm1662, %v1650, 0
        %1666 = vmatprep.subr.mxu0 0.0
        %1667 = vmatpush1.msra.mxu0 %v1651
        %1668 = vmatprep.subr.mxu0 0.0
        %1669 = vmatpush1.msra.mxu0 %v1652
        %1670 = vmatprep.subr.mxu0 0.0
        %1671 = vmatpush1.msra.mxu0 %v1653
        %1672 = vmatprep.subr.mxu0 0.0
        %1673 = vmatpush1.msra.mxu0 %v1654
        %1674 = vmatprep.subr.mxu0 0.0
        %1675 = vmatpush1.msra.mxu0 0.0
        %1676 = vmatprep.subr.mxu0 0.0
        %1677 = vmatpush1.msra.mxu0 0.0
        %1678 = vmatprep.subr.mxu0 0.0
        %1679 = vmatpush1.msra.mxu0 0.0
        %1680 = vmatprep.subr.mxu0 0.0
        %1681 = vmatpush1.msra.mxu0 0.0
        %1682 = vmatprep.subr.mxu0 0.0
        %1683 = vmatpush1.msra.mxu0 0.0
        %1684 = vmatprep.subr.mxu0 0.0
        %1685 = vmatpush1.msra.mxu0 0.0
        %1686 = vmatprep.subr.mxu0 0.0
        %1687 = vmatpush1.msra.mxu0 0.0
        %1688 = vmatprep.subr.mxu0 0.0
        %1689 = vmatpush1.msra.mxu0 0.0
        %1690 = vmatprep.subr.mxu0 0.0
        %1691 = vmatpush1.msra.mxu0 0.0
        %1692 = vmatprep.subr.mxu0 0.0
        %1693 = vmatpush1.msra.mxu0 0.0
        %1694 = vmatprep.subr.mxu0 0.0
        %1695 = vmatpush1.msra.mxu0 0.0
        %1696 = vmatprep.subr.mxu0 0.0
        %1697 = vmatpush1.msra.mxu0 0.0
        %1698 = vmatprep.subr.mxu0 0.0
        %1699 = vmatpush1.msra.mxu0 0.0
        %1700 = vmatprep.subr.mxu0 0.0
        %1701 = vmatpush1.msra.mxu0 0.0
        %1702 = vmatprep.subr.mxu0 0.0
        %1703 = vmatpush1.msra.mxu0 0.0
        %1704 = vmatprep.subr.mxu0 0.0
        %1705 = vmatpush1.msra.mxu0 0.0
        %1706 = vmatprep.subr.mxu0 0.0
        %1707 = vmatpush1.msra.mxu0 0.0
        %1708 = vmatprep.subr.mxu0 0.0
        %1709 = vmatpush1.msra.mxu0 0.0
        %1710 = vmatprep.subr.mxu0 0.0
        %1711 = vmatpush1.msra.mxu0 0.0
        %1712 = vmatprep.subr.mxu0 0.0
        %1713 = vmatpush1.msra.mxu0 0.0
        %1714 = vmatprep.subr.mxu0 0.0
        %1715 = vmatpush1.msra.mxu0 0.0
        %1716 = vmatprep.subr.mxu0 0.0
        %1717 = vmatpush1.msra.mxu0 0.0
        %1718 = vmatprep.subr.mxu0 0.0
        %1719 = vmatpush1.msra.mxu0 0.0
        %1720 = vmatprep.subr.mxu0 0.0
        %1721 = vmatpush1.msra.mxu0 0.0
        %1722 = vmatprep.subr.mxu0 0.0
        %1723 = vmatpush1.msra.mxu0 0.0
        %1724 = vmatprep.subr.mxu0 0.0
        %1725 = vmatpush1.msra.mxu0 0.0
        %1726 = vmatprep.subr.mxu0 0.0
        %1727 = vmatpush1.msra.mxu0 0.0
        %1728 = vmatprep.subr.mxu0 0.0
        %1729 = vmatpush1.msra.mxu0 0.0
        %1730 = vmatprep.mubr.f32.mxu0 0.0
        %1731 = vmatmul.mubr.f32.gmra.mrb[0].mxu0 %v1664
        %v1732 = vpop.f32.mrb[0].mxu0
        %v1733 = vadd.f32 %v1660, %v1732
        %v1734 = vpop.f32.mrb[0].mxu0
        %1735 = vdwg.mxu0
        %v1736 = vld [vmem:[%s8] sm:$0x1]
        %v1737 = vld [vmem:[%s9] sm:$0x1]
        %v1738 = vsel %vm536, %v1733, 0.0
        %1739 = vadd.xlane.f32.xlu0 %v1738
        %v1740 = vpop.xlane.xlu0 %1739
        %v1741 = vmul.f32 %v1740, %v1535
        %v1742 = vsub.f32 %v1733, %v1741
        %v1743 = vmul.f32 %v1742, %v1742
        %v1744 = vsel %vm536, %v1743, 0.0
        %1745 = vadd.xlane.f32.xlu0 %v1744
        %v1746 = vpop.xlane.xlu0 %1745
        %v1747 = vmul.f32 %v1746, %v1535
        %v1748 = vadd.f32 %v1747, 1e-05
        %v1749 = vrsqrt.pop %v1748
        %v1750 = vmul.f32 %v1742, %v1749
        %v1752 = vlaneseq
        %v1753 = vshrl.u32 %v1752, 7
        %v1754 = vsub.s32 0, %v1753
        %v1755 = vrot.slane %v1736, %v1754
        %v1757 = vmul.f32 %v1750, %v1755
        %v1759 = vlaneseq
        %v1760 = vshrl.u32 %v1759, 7
        %v1761 = vsub.s32 0, %v1760
        %v1762 = vrot.slane %v1737, %v1761
        %v1764 = vadd.f32 %v1757, %v1762
        %v1765 = vadd.f32 %v1764, %v1560
        %1766 = vst.msk [vmem:[%s524] sm:$0xff] %vm536, %v1765
        %s1767 = sand.u32 %s343, 1
        %s1768 = scalar_lea.sflag [#allocation4], %s1767
        %s1769 = sand.u32 %s343, 1
        %s1770 = smul.addr %s1769, 8
        %s1771 = scalar_lea.vmem [#allocation10], %s1770
        // Predicated region
        $region93: #{svgtformer.1} parent=75 // pred_check
          %p1772 = pneg %p353
        $region94: #{svgtformer.1} parent=75 // pred_check_branch
          %1774 = sbr.rel (%p1772) target = $region96
        $region95: #{svgtformer.1} parent=75 // pred_region
          %s1776 = ssub.s32 128, 128
          %1777 = vsyncadd %s1768, %s1776
          %s1778 = smul.addr %s31, 128
          %s1779 = scalar_lea.hbm %s14, %s1778
          %s1781 = sshll.u32 %s1771, 4
          %s1782 = int_to_ptr.vmem [resolvable:$true] %s1781
          %1784 = dma.vmem_to_hbm [thread:$0]  %s1782, 128, %s1779, %s1768
        $region96: #{svgtformer.1} parent=75 // pred_fallthru
          _
      $region76: #{svgtformer.1} parent=5 // pred_fallthru
        _
      %p1785 = scmp.le.s32.totalorder 2, %s26
      // Predicated region
      $region97: #{svgtformer.1} parent=5 // pred_check
        %p1786 = pneg %p1785
      $region98: #{svgtformer.1} parent=5 // pred_check_branch
        %1788 = sbr.rel (%p1786) target = $region100
      $region99: #{svgtformer.1} parent=5 // pred_region
        %s1789 = ssub.s32 %s26, 2
        // Predicated region
        $region101: #{svgtformer.1} parent=99 // pred_check
          %p1790 = pneg %p359
        $region102: #{svgtformer.1} parent=99 // pred_check_branch
          %1792 = sbr.rel (%p1790) target = $region104
        $region103: #{svgtformer.1} parent=99 // pred_region
          %s1793 = sand.u32 %s344, 1
          %s1794 = scalar_lea.sflag [#allocation4], %s1793
          %s1795 = sand.u32 %s344, 1
          %s1796 = smul.addr %s1795, 8
          %s1797 = scalar_lea.vmem [#allocation10], %s1796
          %1798 = dma.done %s1794, 128
        $region104: #{svgtformer.1} parent=99 // pred_fallthru
          _
      $region100: #{svgtformer.1} parent=5 // pred_fallthru
        _
    $region6: #{svgtformer.1} parent=1 // loop_footer
      %s30 = sadd.s32 1, %s26
    $region7: #{svgtformer.1} parent=1 // loop_footer_branch
      %25 = sbr.rel target = $region3
    $region8: #{svgtformer.1} parent=1 // loop_exit
      _
    %1799 = vsyncpa [#allocation3], 1
    %s1800 = scalar_lea.sflag [#allocation3], 1
    %1801 = vsyncpa %s1800, 1
    %1802 = vsyncpa [#allocation6], 1
    %1803 = vsyncpa [#allocation9], 1
    %1804 = vsyncpa [#allocation4], 1
    %s1805 = scalar_lea.sflag [#allocation4], 1
    %1806 = vsyncpa %s1805, 1

</llo_original>
